<compile_context>
chip_gen: v6e
topology: v6e:2x2x1
jax: 0.10.0
libtpu: 0.0.40
codegen_flags: <defaults>
</compile_context>

<pallas_src>
import functools

import jax
import jax.numpy as jnp
import numpy as np
from jax.experimental import pallas as pl
from jax.experimental.pallas import tpu as pltpu


# ----------------------------------------------------------------------------- kernel

def _gvp_update_kernel(*refs, num_layers, layer_dims):
    n_fixed = 6
    per_layer = 4
    (s_res_ref, v_res_ref, ms_ref, mv_ref, ln1_ref, ln2_ref) = refs[:n_fixed]
    layer_refs = refs[n_fixed:n_fixed + per_layer * num_layers]
    out_s_ref, out_v_ref = refs[n_fixed + per_layer * num_layers:]

    f32 = jnp.float32
    eps = 1e-5  # torch nn.LayerNorm default

    def scalar_layer_norm(x, gb_ref):
        # x: (S, T) feature-major; gb_ref: (S, 2) with gamma in column 0, beta in column 1.
        gb = gb_ref[...]
        gamma, beta = gb[:, 0:1], gb[:, 1:2]
        mean = jnp.mean(x, axis=0, keepdims=True)              # (1, T)
        cen = x - mean
        var = jnp.mean(cen * cen, axis=0, keepdims=True)       # (1, T)
        return cen * jax.lax.rsqrt(var + eps) * gamma + beta

    def vector_frob_scale(v0, v1, v2):
        # components: (V, T).  Frobenius norm over the (V, 3) matrix of each row (lane).
        sq = v0 * v0 + v1 * v1 + v2 * v2                        # (V, T)
        nsq = jnp.sum(sq, axis=0, keepdims=True)                # (1, T)
        v_channels = f32(v0.shape[0])
        return jnp.where(nsq > 0.0, jnp.sqrt(v_channels) * jax.lax.rsqrt(nsq), 1.0)

    # ---------------- GVPLayerNorm 1 (message features) ----------------
    s = scalar_layer_norm(ms_ref[...], ln1_ref)                 # (S_in, T)
    mv = (mv_ref[0], mv_ref[1], mv_ref[2])                      # 3 x (V_in, T)
    scale1 = vector_frob_scale(*mv)
    v = tuple(c * scale1 for c in mv)

    # TODO(synk): GVPDropout is identity in eval mode; training-mode stochastic masking
    # (per-element for scalars, per-3D-vector for vectors, via pltpu.prng_*) not implemented.

    # ---------------- GVP stack ----------------
    for l in range(num_layers):
        wv_ref, ws_ref, wn_ref, b_ref = layer_refs[per_layer * l:per_layer * (l + 1)]
        s_cur, h, so, vo = layer_dims[l]

        # Fused vector projection [Wvs; Wvv] @ v_e per spatial component: (h+vo, T)
        wv = wv_ref[...]
        r = tuple(jnp.dot(wv, v[e], preferred_element_type=f32) for e in range(3))
        # rows 0:h -> norms for the scalar path, rows h:h+vo -> norms for the vector gate
        norms_all = jnp.sqrt(r[0] * r[0] + r[1] * r[1] + r[2] * r[2])   # (h+vo, T)

        # torch.cat([s, norms]) @ W.T folded into: fused matmul on s + block-diag matmul
        # on the stacked norms (so+vo outputs = [scalar path ; vector-gate path]).
        pre = (jnp.dot(ws_ref[...], s, preferred_element_type=f32)
               + jnp.dot(wn_ref[...], norms_all, preferred_element_type=f32)
               + b_ref[...])                                    # (so+vo, T)

        s = jnp.maximum(pre[:so], 0.0)                          # ReLU -> new scalars (so, T)
        gate = 0.5 * (jnp.tanh(0.5 * pre[so:so + vo]) + 1.0)    # Sigmoid via EUP tanh (vo, T)
        v = tuple(gate * r[e][h:h + vo] for e in range(3))      # gated vector channels

    # ---------------- residual ----------------
    s = s + s_res_ref[...]
    v = tuple(v[e] + v_res_ref[e] for e in range(3))

    # ---------------- GVPLayerNorm 2 (state features) ----------------
    out_s_ref[...] = scalar_layer_norm(s, ln2_ref)
    scale2 = vector_frob_scale(*v)
    for e in range(3):
        out_v_ref[e] = v[e] * scale2


# ----------------------------------------------------------------------------- wrapper

def _full_spec(arr):
    zeros = (0,) * arr.ndim
    return pl.BlockSpec(arr.shape, lambda i, _z=zeros: _z)


def _default_tile(n):
    if n % 128 != 0:
        return n                    # full-extent block (allowed); pad rows upstream for best perf
    t = min(1024, n)
    t -= t % 128
    while n % t != 0:
        t -= 128
    return t


def gvp_update_forward(params, scalar_features, message_scalar_features,
                       vector_features, message_vector_features, *, tile_n=None):
    """GVPUpdate forward (eval mode) in feature-major / lane-dense layout.

    scalar_features:          (S_state, N)
    message_scalar_features:  (S_in, N)
    vector_features:          (3, V_state, N)   (spatial component, channel, row)
    message_vector_features:  (3, V_in, N)
    Returns scalars (S_state, N) and vectors (3, V_state, N).
    """
    f32 = jnp.float32
    S_state, N = scalar_features.shape
    S_in = message_scalar_features.shape[0]
    V_state = vector_features.shape[1]
    V_in = message_vector_features.shape[1]
    num_layers = len(params["layers"])

    if tile_n is None:
        tile_n = _default_tile(N)
    assert N % tile_n == 0, "tile_n must divide N"
    assert tile_n == N or tile_n % 128 == 0, "tile_n must be a multiple of 128 (or all of N)"
    grid = (N // tile_n,)

    def col2d(x):
        return jnp.asarray(x, f32).reshape(-1, 1)

    inputs = [
        jnp.asarray(scalar_features, f32),                      # (S_state, N)
        jnp.asarray(vector_features, f32),                      # (3, V_state, N)
        jnp.asarray(message_scalar_features, f32),              # (S_in, N)
        jnp.asarray(message_vector_features, f32),              # (3, V_in, N)
        jnp.stack([jnp.asarray(params["ln1_gamma"], f32),
                   jnp.asarray(params["ln1_beta"], f32)], axis=1),   # (S_in, 2)
        jnp.stack([jnp.asarray(params["ln2_gamma"], f32),
                   jnp.asarray(params["ln2_beta"], f32)], axis=1),   # (S_state, 2)
    ]
    in_specs = [
        pl.BlockSpec((S_state, tile_n), lambda i: (0, i)),
        pl.BlockSpec((3, V_state, tile_n), lambda i: (0, 0, i)),
        pl.BlockSpec((S_in, tile_n), lambda i: (0, i)),
        pl.BlockSpec((3, V_in, tile_n), lambda i: (0, 0, i)),
        _full_spec(inputs[4]), _full_spec(inputs[5]),
    ]

    layer_dims = []
    s_cur = S_in
    for lp in params["layers"]:
        Wvs = jnp.asarray(lp["Wvs"], f32)       # (h,  Vi)
        Wvv = jnp.asarray(lp["Wvv"], f32)       # (Vo, Vi)
        Wsc = jnp.asarray(lp["Wsc"], f32)       # (So, s_cur + h)
        Wvn = jnp.asarray(lp["Wvn"], f32)       # (Vo, s_cur + Vo)
        h, vo, so = Wvs.shape[0], Wvv.shape[0], Wsc.shape[0]

        wv_fused = jnp.concatenate([Wvs, Wvv], axis=0)                         # (h+vo, Vi)
        ws_fused = jnp.concatenate([Wsc[:, :s_cur], Wvn[:, :s_cur]], axis=0)   # (so+vo, s_cur)
        wn_fused = jnp.zeros((so + vo, h + vo), f32)                           # block-diag
        wn_fused = wn_fused.at[:so, :h].set(Wsc[:, s_cur:])
        wn_fused = wn_fused.at[so:, h:].set(Wvn[:, s_cur:])
        b_fused = jnp.concatenate([col2d(lp["bsc"]), col2d(lp["bvn"])], axis=0)  # (so+vo, 1)

        layer_arrays = [wv_fused, ws_fused, wn_fused, b_fused]
        inputs += layer_arrays
        in_specs += [_full_spec(a) for a in layer_arrays]
        layer_dims.append((s_cur, h, so, vo))
        s_cur = so

    kernel = functools.partial(_gvp_update_kernel, num_layers=num_layers,
                               layer_dims=tuple(layer_dims))

    return pl.pallas_call(
        kernel,
        out_shape=(jax.ShapeDtypeStruct((S_state, N), f32),
                   jax.ShapeDtypeStruct((3, V_state, N), f32)),
        grid=grid,
        in_specs=in_specs,
        out_specs=(pl.BlockSpec((S_state, tile_n), lambda i: (0, i)),
                   pl.BlockSpec((3, V_state, tile_n), lambda i: (0, 0, i))),
        compiler_params=pltpu.CompilerParams(
            dimension_semantics=("parallel",),
            vmem_limit_bytes=32 * 1024 * 1024),
    )(*inputs)


# ----------------------------------------------------------------------------- reference

def gvp_update_reference(params, scalar_features, message_scalar_features,
                         vector_features, message_vector_features):
    """Pure-JAX mirror of the PyTorch GVPUpdate.forward (eval mode), PyTorch layout."""
    eps = 1e-5

    def scalar_ln(x, gamma, beta):
        mean = x.mean(-1, keepdims=True)
        var = ((x - mean) ** 2).mean(-1, keepdims=True)
        return (x - mean) / jnp.sqrt(var + eps) * gamma + beta

    def vector_ln(v):
        channels = v.shape[-2]
        norm = jnp.sqrt(jnp.sum(v * v, axis=(-2, -1), keepdims=True))
        return jnp.where(norm > 0.0, jnp.sqrt(float(channels)) * v / norm, v)

    s = scalar_ln(message_scalar_features, params["ln1_gamma"], params["ln1_beta"])
    v = vector_ln(message_vector_features)

    for lp in params["layers"]:
        vfs = jnp.swapaxes(jnp.swapaxes(v, -2, -1) @ lp["Wvs"].T, -2, -1)   # (N, h, 3)
        vfv = jnp.swapaxes(jnp.swapaxes(v, -2, -1) @ lp["Wvv"].T, -2, -1)   # (N, Vo, 3)
        norms_s = jnp.sqrt(jnp.sum(vfs * vfs, axis=-1))
        norms_v = jnp.sqrt(jnp.sum(vfv * vfv, axis=-1))
        new_s = jax.nn.relu(jnp.concatenate([s, norms_s], -1) @ lp["Wsc"].T + lp["bsc"])
        gate = jax.nn.sigmoid(jnp.concatenate([s, norms_v], -1) @ lp["Wvn"].T + lp["bvn"])
        v = gate[..., None] * vfv
        s = new_s

    s = s + scalar_features
    v = v + vector_features
    return scalar_ln(s, params["ln2_gamma"], params["ln2_beta"]), vector_ln(v)


# ----------------------------------------------------------------------------- params

def init_gvp_update_params(key, state_scalar, in_scalar, state_vector, in_vector, num_gvps):
    keys = jax.random.split(key, 4 + 6 * num_gvps)
    params = {
        "ln1_gamma": 1.0 + 0.1 * jax.random.normal(keys[0], (in_scalar,), jnp.float32),
        "ln1_beta": 0.1 * jax.random.normal(keys[1], (in_scalar,), jnp.float32),
        "ln2_gamma": 1.0 + 0.1 * jax.random.normal(keys[2], (state_scalar,), jnp.float32),
        "ln2_beta": 0.1 * jax.random.normal(keys[3], (state_scalar,), jnp.float32),
        "layers": [],
    }
    si, vi = in_scalar, in_vector
    kidx = 4
    for _ in range(num_gvps):
        so, vo = state_scalar, state_vector
        h = max(vi, vo)

        def lin(k, out_f, in_f):
            return jax.random.normal(k, (out_f, in_f), jnp.float32) / np.sqrt(in_f)

        params["layers"].append({
            "Wvs": lin(keys[kidx + 0], h, vi),             # W_vec_for_scalar (no bias)
            "Wvv": lin(keys[kidx + 1], vo, vi),            # W_vec_for_vec    (no bias)
            "Wsc": lin(keys[kidx + 2], so, si + h),        # scalar non-linearity Linear
            "bsc": 0.1 * jax.random.normal(keys[kidx + 3], (so,), jnp.float32),
            "Wvn": lin(keys[kidx + 4], vo, si + vo),       # vector non-linearity Linear
            "bvn": 0.1 * jax.random.normal(keys[kidx + 5], (vo,), jnp.float32),
        })
        kidx += 6
        si, vi = so, vo
    return params


# ----------------------------------------------------------------------------- main

if __name__ == "__main__":
    N = 256                    # rows (nodes/edges), multiple of 128 for lane-dense tiles
    S_in, V_in = 16, 8         # message (input) scalar / vector channels
    S_state, V_state = 32, 8   # state (output) scalar / vector channels
    num_gvps = 2

    key = jax.random.PRNGKey(0)
    k_data, k_param = jax.random.split(key)
    kd = jax.random.split(k_data, 4)

    scalar_features = jax.random.normal(kd[0], (N, S_state), jnp.float32)
    vector_features = jax.random.normal(kd[1], (N, V_state, 3), jnp.float32)
    message_scalar_features = jax.random.normal(kd[2], (N, S_in), jnp.float32)
    message_vector_features = jax.random.normal(kd[3], (N, V_in, 3), jnp.float32)

    params = init_gvp_update_params(k_param, S_state, S_in, V_state, V_in, num_gvps)

    # Feature-major copies for the kernel (layout conversion is test/data-prep only;
    # production callers should keep features feature-major so no transposes are needed).
    s_fm = scalar_features.T                                     # (S_state, N)
    ms_fm = message_scalar_features.T                            # (S_in, N)
    v_fm = jnp.transpose(vector_features, (2, 1, 0))             # (3, V_state, N)
    mv_fm = jnp.transpose(message_vector_features, (2, 1, 0))    # (3, V_in, N)

    out_s, out_v = gvp_update_forward(params, s_fm, ms_fm, v_fm, mv_fm, tile_n=128)
    out_s = jax.block_until_ready(out_s)
    out_v = jax.block_until_ready(out_v)

    with jax.default_matmul_precision("float32"):
        ref_s, ref_v = gvp_update_reference(
            params, scalar_features, message_scalar_features,
            vector_features, message_vector_features,
        )
        ref_s = jax.block_until_ready(ref_s)
        ref_v = jax.block_until_ready(ref_v)

    np.testing.assert_allclose(np.asarray(out_s), np.asarray(ref_s.T),
                               rtol=1e-3, atol=1e-4)
    np.testing.assert_allclose(np.asarray(out_v),
                               np.asarray(jnp.transpose(ref_v, (2, 1, 0))),
                               rtol=1e-3, atol=1e-4)

    print("KERNEL_OK")
</pallas_src>

<mosaic_0001>
module attributes {stable_mosaic.version = 11 : i64} {
  func.func @_gvp_update_kernel(%arg0: i32, %arg1: memref<32x128xf32, #tpu.memory_space<vmem>>, %arg2: memref<3x8x128xf32, #tpu.memory_space<vmem>>, %arg3: memref<16x128xf32, #tpu.memory_space<vmem>>, %arg4: memref<3x8x128xf32, #tpu.memory_space<vmem>>, %arg5: memref<16x2xf32, #tpu.memory_space<vmem>>, %arg6: memref<32x2xf32, #tpu.memory_space<vmem>>, %arg7: memref<16x8xf32, #tpu.memory_space<vmem>>, %arg8: memref<40x16xf32, #tpu.memory_space<vmem>>, %arg9: memref<40x16xf32, #tpu.memory_space<vmem>>, %arg10: memref<40x1xf32, #tpu.memory_space<vmem>>, %arg11: memref<16x8xf32, #tpu.memory_space<vmem>>, %arg12: memref<40x32xf32, #tpu.memory_space<vmem>>, %arg13: memref<40x16xf32, #tpu.memory_space<vmem>>, %arg14: memref<40x1xf32, #tpu.memory_space<vmem>>, %arg15: memref<32x128xf32, #tpu.memory_space<vmem>>, %arg16: memref<3x8x128xf32, #tpu.memory_space<vmem>>) attributes {dimension_semantics = [#tpu.dimension_semantics<parallel>], iteration_bounds = array<i64: 2>, scalar_prefetch = 0 : i64, scratch_operands = 0 : i64, tpu.core_type = #tpu.core_type<tc>, window_params = [{transform_indices = @transform_0, window_bounds = array<i64: 32, 128>}, {transform_indices = @transform_1, window_bounds = array<i64: 3, 8, 128>}, {transform_indices = @transform_2, window_bounds = array<i64: 16, 128>}, {transform_indices = @transform_3, window_bounds = array<i64: 3, 8, 128>}, {pipeline_mode = #tpu.pipeline_mode<synchronous>, transform_indices = @transform_4, window_bounds = array<i64: 16, 2>}, {pipeline_mode = #tpu.pipeline_mode<synchronous>, transform_indices = @transform_5, window_bounds = array<i64: 32, 2>}, {pipeline_mode = #tpu.pipeline_mode<synchronous>, transform_indices = @transform_6, window_bounds = array<i64: 16, 8>}, {pipeline_mode = #tpu.pipeline_mode<synchronous>, transform_indices = @transform_7, window_bounds = array<i64: 40, 16>}, {pipeline_mode = #tpu.pipeline_mode<synchronous>, transform_indices = @transform_8, window_bounds = array<i64: 40, 16>}, {pipeline_mode = #tpu.pipeline_mode<synchronous>, transform_indices = @transform_9, window_bounds = array<i64: 40, 1>}, {pipeline_mode = #tpu.pipeline_mode<synchronous>, transform_indices = @transform_10, window_bounds = array<i64: 16, 8>}, {pipeline_mode = #tpu.pipeline_mode<synchronous>, transform_indices = @transform_11, window_bounds = array<i64: 40, 32>}, {pipeline_mode = #tpu.pipeline_mode<synchronous>, transform_indices = @transform_12, window_bounds = array<i64: 40, 16>}, {pipeline_mode = #tpu.pipeline_mode<synchronous>, transform_indices = @transform_13, window_bounds = array<i64: 40, 1>}, {transform_indices = @transform_14, window_bounds = array<i64: 32, 128>}, {transform_indices = @transform_15, window_bounds = array<i64: 3, 8, 128>}]} {
    %c0 = arith.constant 0 : index
    %c0_0 = arith.constant 0 : index
    %0 = vector.load %arg3[%c0, %c0_0] : memref<16x128xf32, #tpu.memory_space<vmem>>, vector<16x128xf32>
    %c0_1 = arith.constant 0 : index
    %c0_2 = arith.constant 0 : index
    %1 = vector.load %arg5[%c0_1, %c0_2] : memref<16x2xf32, #tpu.memory_space<vmem>>, vector<16x2xf32>
    %2 = vector.extract_strided_slice %1 {offsets = [0, 0], sizes = [16, 1], strides = [1, 1]} : vector<16x2xf32> to vector<16x1xf32>
    %3 = vector.extract_strided_slice %1 {offsets = [0, 1], sizes = [16, 1], strides = [1, 1]} : vector<16x2xf32> to vector<16x1xf32>
    %cst = arith.constant dense<0.000000e+00> : vector<128xf32>
    %4 = vector.multi_reduction <add>, %0, %cst [0] : vector<16x128xf32> to vector<128xf32>
    %5 = vector.shape_cast %4 : vector<128xf32> to vector<1x128xf32>
    %cst_3 = arith.constant 1.600000e+01 : f32
    %6 = vector.broadcast %cst_3 : f32 to vector<1x128xf32>
    %7 = arith.divf %5, %6 : vector<1x128xf32>
    %8 = vector.broadcast %7 : vector<1x128xf32> to vector<16x128xf32>
    %9 = arith.subf %0, %8 : vector<16x128xf32>
    %10 = arith.mulf %9, %9 : vector<16x128xf32>
    %cst_4 = arith.constant dense<0.000000e+00> : vector<128xf32>
    %11 = vector.multi_reduction <add>, %10, %cst_4 [0] : vector<16x128xf32> to vector<128xf32>
    %12 = vector.shape_cast %11 : vector<128xf32> to vector<1x128xf32>
    %cst_5 = arith.constant 1.600000e+01 : f32
    %13 = vector.broadcast %cst_5 : f32 to vector<1x128xf32>
    %14 = arith.divf %12, %13 : vector<1x128xf32>
    %cst_6 = arith.constant 9.99999974E-6 : f32
    %15 = vector.broadcast %cst_6 : f32 to vector<1x128xf32>
    %16 = arith.addf %14, %15 : vector<1x128xf32>
    %17 = math.rsqrt %16 : vector<1x128xf32>
    %18 = vector.broadcast %17 : vector<1x128xf32> to vector<16x128xf32>
    %19 = arith.mulf %9, %18 : vector<16x128xf32>
    %20 = vector.broadcast %2 : vector<16x1xf32> to vector<16x128xf32>
    %21 = arith.mulf %19, %20 : vector<16x128xf32>
    %22 = vector.broadcast %3 : vector<16x1xf32> to vector<16x128xf32>
    %23 = arith.addf %21, %22 : vector<16x128xf32>
    %c0_7 = arith.constant 0 : index
    %c0_8 = arith.constant 0 : index
    %c0_9 = arith.constant 0 : index
    %24 = vector.load %arg4[%c0_7, %c0_8, %c0_9] : memref<3x8x128xf32, #tpu.memory_space<vmem>>, vector<1x8x128xf32>
    %25 = vector.shape_cast %24 : vector<1x8x128xf32> to vector<8x128xf32>
    %c1 = arith.constant 1 : index
    %c0_10 = arith.constant 0 : index
    %c0_11 = arith.constant 0 : index
    %26 = vector.load %arg4[%c1, %c0_10, %c0_11] : memref<3x8x128xf32, #tpu.memory_space<vmem>>, vector<1x8x128xf32>
    %27 = vector.shape_cast %26 : vector<1x8x128xf32> to vector<8x128xf32>
    %c2 = arith.constant 2 : index
    %c0_12 = arith.constant 0 : index
    %c0_13 = arith.constant 0 : index
    %28 = vector.load %arg4[%c2, %c0_12, %c0_13] : memref<3x8x128xf32, #tpu.memory_space<vmem>>, vector<1x8x128xf32>
    %29 = vector.shape_cast %28 : vector<1x8x128xf32> to vector<8x128xf32>
    %30 = arith.mulf %25, %25 : vector<8x128xf32>
    %31 = arith.mulf %27, %27 : vector<8x128xf32>
    %32 = arith.addf %30, %31 : vector<8x128xf32>
    %33 = arith.mulf %29, %29 : vector<8x128xf32>
    %34 = arith.addf %32, %33 : vector<8x128xf32>
    %cst_14 = arith.constant dense<0.000000e+00> : vector<128xf32>
    %35 = vector.multi_reduction <add>, %34, %cst_14 [0] : vector<8x128xf32> to vector<128xf32>
    %36 = vector.shape_cast %35 : vector<128xf32> to vector<1x128xf32>
    %cst_15 = arith.constant 0.000000e+00 : f32
    %37 = vector.broadcast %cst_15 : f32 to vector<1x128xf32>
    %38 = arith.cmpf ogt, %36, %37 : vector<1x128xf32>
    %cst_16 = arith.constant 8.000000e+00 : f32
    %39 = math.sqrt %cst_16 : f32
    %40 = math.rsqrt %36 : vector<1x128xf32>
    %41 = vector.broadcast %39 : f32 to vector<1x128xf32>
    %42 = arith.mulf %41, %40 : vector<1x128xf32>
    %cst_17 = arith.constant 1.000000e+00 : f32
    %43 = vector.broadcast %cst_17 : f32 to vector<1x128xf32>
    %44 = arith.select %38, %42, %43 : vector<1x128xi1>, vector<1x128xf32>
    %45 = vector.broadcast %44 : vector<1x128xf32> to vector<8x128xf32>
    %46 = arith.mulf %25, %45 : vector<8x128xf32>
    %47 = vector.broadcast %44 : vector<1x128xf32> to vector<8x128xf32>
    %48 = arith.mulf %27, %47 : vector<8x128xf32>
    %49 = vector.broadcast %44 : vector<1x128xf32> to vector<8x128xf32>
    %50 = arith.mulf %29, %49 : vector<8x128xf32>
    %c0_18 = arith.constant 0 : index
    %c0_19 = arith.constant 0 : index
    %51 = vector.load %arg7[%c0_18, %c0_19] : memref<16x8xf32, #tpu.memory_space<vmem>>, vector<16x8xf32>
    %cst_20 = arith.constant dense<0.000000e+00> : vector<16x128xf32>
    %52 = tpu.matmul %51, %46, %cst_20 {dimension_numbers = #tpu.dot_dimension_numbers<[1], [0], [0], [1], [0, 0, 1, 1], [], []>} : vector<16x8xf32>, vector<8x128xf32>, vector<16x128xf32> -> vector<16x128xf32>
    %cst_21 = arith.constant dense<0.000000e+00> : vector<16x128xf32>
    %53 = tpu.matmul %51, %48, %cst_21 {dimension_numbers = #tpu.dot_dimension_numbers<[1], [0], [0], [1], [0, 0, 1, 1], [], []>} : vector<16x8xf32>, vector<8x128xf32>, vector<16x128xf32> -> vector<16x128xf32>
    %cst_22 = arith.constant dense<0.000000e+00> : vector<16x128xf32>
    %54 = tpu.matmul %51, %50, %cst_22 {dimension_numbers = #tpu.dot_dimension_numbers<[1], [0], [0], [1], [0, 0, 1, 1], [], []>} : vector<16x8xf32>, vector<8x128xf32>, vector<16x128xf32> -> vector<16x128xf32>
    %55 = arith.mulf %52, %52 : vector<16x128xf32>
    %56 = arith.mulf %53, %53 : vector<16x128xf32>
    %57 = arith.addf %55, %56 : vector<16x128xf32>
    %58 = arith.mulf %54, %54 : vector<16x128xf32>
    %59 = arith.addf %57, %58 : vector<16x128xf32>
    %60 = math.sqrt %59 : vector<16x128xf32>
    %c0_23 = arith.constant 0 : index
    %c0_24 = arith.constant 0 : index
    %61 = vector.load %arg8[%c0_23, %c0_24] : memref<40x16xf32, #tpu.memory_space<vmem>>, vector<40x16xf32>
    %cst_25 = arith.constant dense<0.000000e+00> : vector<40x128xf32>
    %62 = tpu.matmul %61, %23, %cst_25 {dimension_numbers = #tpu.dot_dimension_numbers<[1], [0], [0], [1], [0, 0, 1, 1], [], []>} : vector<40x16xf32>, vector<16x128xf32>, vector<40x128xf32> -> vector<40x128xf32>
    %c0_26 = arith.constant 0 : index
    %c0_27 = arith.constant 0 : index
    %63 = vector.load %arg9[%c0_26, %c0_27] : memref<40x16xf32, #tpu.memory_space<vmem>>, vector<40x16xf32>
    %cst_28 = arith.constant dense<0.000000e+00> : vector<40x128xf32>
    %64 = tpu.matmul %63, %60, %cst_28 {dimension_numbers = #tpu.dot_dimension_numbers<[1], [0], [0], [1], [0, 0, 1, 1], [], []>} : vector<40x16xf32>, vector<16x128xf32>, vector<40x128xf32> -> vector<40x128xf32>
    %65 = arith.addf %62, %64 : vector<40x128xf32>
    %c0_29 = arith.constant 0 : index
    %c0_30 = arith.constant 0 : index
    %66 = vector.load %arg10[%c0_29, %c0_30] : memref<40x1xf32, #tpu.memory_space<vmem>>, vector<40x1xf32>
    %67 = vector.broadcast %66 : vector<40x1xf32> to vector<40x128xf32>
    %68 = arith.addf %65, %67 : vector<40x128xf32>
    %69 = vector.extract_strided_slice %68 {offsets = [0, 0], sizes = [32, 128], strides = [1, 1]} : vector<40x128xf32> to vector<32x128xf32>
    %cst_31 = arith.constant 0.000000e+00 : f32
    %70 = vector.broadcast %cst_31 : f32 to vector<32x128xf32>
    %71 = arith.maximumf %69, %70 : vector<32x128xf32>
    %72 = vector.extract_strided_slice %68 {offsets = [32, 0], sizes = [8, 128], strides = [1, 1]} : vector<40x128xf32> to vector<8x128xf32>
    %cst_32 = arith.constant 5.000000e-01 : f32
    %73 = vector.broadcast %cst_32 : f32 to vector<8x128xf32>
    %74 = arith.mulf %73, %72 : vector<8x128xf32>
    %75 = math.tanh %74 : vector<8x128xf32>
    %cst_33 = arith.constant 1.000000e+00 : f32
    %76 = vector.broadcast %cst_33 : f32 to vector<8x128xf32>
    %77 = arith.addf %75, %76 : vector<8x128xf32>
    %cst_34 = arith.constant 5.000000e-01 : f32
    %78 = vector.broadcast %cst_34 : f32 to vector<8x128xf32>
    %79 = arith.mulf %78, %77 : vector<8x128xf32>
    %80 = vector.extract_strided_slice %52 {offsets = [8, 0], sizes = [8, 128], strides = [1, 1]} : vector<16x128xf32> to vector<8x128xf32>
    %81 = arith.mulf %79, %80 : vector<8x128xf32>
    %82 = vector.extract_strided_slice %53 {offsets = [8, 0], sizes = [8, 128], strides = [1, 1]} : vector<16x128xf32> to vector<8x128xf32>
    %83 = arith.mulf %79, %82 : vector<8x128xf32>
    %84 = vector.extract_strided_slice %54 {offsets = [8, 0], sizes = [8, 128], strides = [1, 1]} : vector<16x128xf32> to vector<8x128xf32>
    %85 = arith.mulf %79, %84 : vector<8x128xf32>
    %c0_35 = arith.constant 0 : index
    %c0_36 = arith.constant 0 : index
    %86 = vector.load %arg11[%c0_35, %c0_36] : memref<16x8xf32, #tpu.memory_space<vmem>>, vector<16x8xf32>
    %cst_37 = arith.constant dense<0.000000e+00> : vector<16x128xf32>
    %87 = tpu.matmul %86, %81, %cst_37 {dimension_numbers = #tpu.dot_dimension_numbers<[1], [0], [0], [1], [0, 0, 1, 1], [], []>} : vector<16x8xf32>, vector<8x128xf32>, vector<16x128xf32> -> vector<16x128xf32>
    %cst_38 = arith.constant dense<0.000000e+00> : vector<16x128xf32>
    %88 = tpu.matmul %86, %83, %cst_38 {dimension_numbers = #tpu.dot_dimension_numbers<[1], [0], [0], [1], [0, 0, 1, 1], [], []>} : vector<16x8xf32>, vector<8x128xf32>, vector<16x128xf32> -> vector<16x128xf32>
    %cst_39 = arith.constant dense<0.000000e+00> : vector<16x128xf32>
    %89 = tpu.matmul %86, %85, %cst_39 {dimension_numbers = #tpu.dot_dimension_numbers<[1], [0], [0], [1], [0, 0, 1, 1], [], []>} : vector<16x8xf32>, vector<8x128xf32>, vector<16x128xf32> -> vector<16x128xf32>
    %90 = arith.mulf %87, %87 : vector<16x128xf32>
    %91 = arith.mulf %88, %88 : vector<16x128xf32>
    %92 = arith.addf %90, %91 : vector<16x128xf32>
    %93 = arith.mulf %89, %89 : vector<16x128xf32>
    %94 = arith.addf %92, %93 : vector<16x128xf32>
    %95 = math.sqrt %94 : vector<16x128xf32>
    %c0_40 = arith.constant 0 : index
    %c0_41 = arith.constant 0 : index
    %96 = vector.load %arg12[%c0_40, %c0_41] : memref<40x32xf32, #tpu.memory_space<vmem>>, vector<40x32xf32>
    %cst_42 = arith.constant dense<0.000000e+00> : vector<40x128xf32>
    %97 = tpu.matmul %96, %71, %cst_42 {dimension_numbers = #tpu.dot_dimension_numbers<[1], [0], [0], [1], [0, 0, 1, 1], [], []>} : vector<40x32xf32>, vector<32x128xf32>, vector<40x128xf32> -> vector<40x128xf32>
    %c0_43 = arith.constant 0 : index
    %c0_44 = arith.constant 0 : index
    %98 = vector.load %arg13[%c0_43, %c0_44] : memref<40x16xf32, #tpu.memory_space<vmem>>, vector<40x16xf32>
    %cst_45 = arith.constant dense<0.000000e+00> : vector<40x128xf32>
    %99 = tpu.matmul %98, %95, %cst_45 {dimension_numbers = #tpu.dot_dimension_numbers<[1], [0], [0], [1], [0, 0, 1, 1], [], []>} : vector<40x16xf32>, vector<16x128xf32>, vector<40x128xf32> -> vector<40x128xf32>
    %100 = arith.addf %97, %99 : vector<40x128xf32>
    %c0_46 = arith.constant 0 : index
    %c0_47 = arith.constant 0 : index
    %101 = vector.load %arg14[%c0_46, %c0_47] : memref<40x1xf32, #tpu.memory_space<vmem>>, vector<40x1xf32>
    %102 = vector.broadcast %101 : vector<40x1xf32> to vector<40x128xf32>
    %103 = arith.addf %100, %102 : vector<40x128xf32>
    %104 = vector.extract_strided_slice %103 {offsets = [0, 0], sizes = [32, 128], strides = [1, 1]} : vector<40x128xf32> to vector<32x128xf32>
    %cst_48 = arith.constant 0.000000e+00 : f32
    %105 = vector.broadcast %cst_48 : f32 to vector<32x128xf32>
    %106 = arith.maximumf %104, %105 : vector<32x128xf32>
    %107 = vector.extract_strided_slice %103 {offsets = [32, 0], sizes = [8, 128], strides = [1, 1]} : vector<40x128xf32> to vector<8x128xf32>
    %cst_49 = arith.constant 5.000000e-01 : f32
    %108 = vector.broadcast %cst_49 : f32 to vector<8x128xf32>
    %109 = arith.mulf %108, %107 : vector<8x128xf32>
    %110 = math.tanh %109 : vector<8x128xf32>
    %cst_50 = arith.constant 1.000000e+00 : f32
    %111 = vector.broadcast %cst_50 : f32 to vector<8x128xf32>
    %112 = arith.addf %110, %111 : vector<8x128xf32>
    %cst_51 = arith.constant 5.000000e-01 : f32
    %113 = vector.broadcast %cst_51 : f32 to vector<8x128xf32>
    %114 = arith.mulf %113, %112 : vector<8x128xf32>
    %115 = vector.extract_strided_slice %87 {offsets = [8, 0], sizes = [8, 128], strides = [1, 1]} : vector<16x128xf32> to vector<8x128xf32>
    %116 = arith.mulf %114, %115 : vector<8x128xf32>
    %117 = vector.extract_strided_slice %88 {offsets = [8, 0], sizes = [8, 128], strides = [1, 1]} : vector<16x128xf32> to vector<8x128xf32>
    %118 = arith.mulf %114, %117 : vector<8x128xf32>
    %119 = vector.extract_strided_slice %89 {offsets = [8, 0], sizes = [8, 128], strides = [1, 1]} : vector<16x128xf32> to vector<8x128xf32>
    %120 = arith.mulf %114, %119 : vector<8x128xf32>
    %c0_52 = arith.constant 0 : index
    %c0_53 = arith.constant 0 : index
    %121 = vector.load %arg1[%c0_52, %c0_53] : memref<32x128xf32, #tpu.memory_space<vmem>>, vector<32x128xf32>
    %122 = arith.addf %106, %121 : vector<32x128xf32>
    %c0_54 = arith.constant 0 : index
    %c0_55 = arith.constant 0 : index
    %c0_56 = arith.constant 0 : index
    %123 = vector.load %arg2[%c0_54, %c0_55, %c0_56] : memref<3x8x128xf32, #tpu.memory_space<vmem>>, vector<1x8x128xf32>
    %124 = vector.shape_cast %123 : vector<1x8x128xf32> to vector<8x128xf32>
    %125 = arith.addf %116, %124 : vector<8x128xf32>
    %c1_57 = arith.constant 1 : index
    %c0_58 = arith.constant 0 : index
    %c0_59 = arith.constant 0 : index
    %126 = vector.load %arg2[%c1_57, %c0_58, %c0_59] : memref<3x8x128xf32, #tpu.memory_space<vmem>>, vector<1x8x128xf32>
    %127 = vector.shape_cast %126 : vector<1x8x128xf32> to vector<8x128xf32>
    %128 = arith.addf %118, %127 : vector<8x128xf32>
    %c2_60 = arith.constant 2 : index
    %c0_61 = arith.constant 0 : index
    %c0_62 = arith.constant 0 : index
    %129 = vector.load %arg2[%c2_60, %c0_61, %c0_62] : memref<3x8x128xf32, #tpu.memory_space<vmem>>, vector<1x8x128xf32>
    %130 = vector.shape_cast %129 : vector<1x8x128xf32> to vector<8x128xf32>
    %131 = arith.addf %120, %130 : vector<8x128xf32>
    %c0_63 = arith.constant 0 : index
    %c0_64 = arith.constant 0 : index
    %132 = vector.load %arg6[%c0_63, %c0_64] : memref<32x2xf32, #tpu.memory_space<vmem>>, vector<32x2xf32>
    %133 = vector.extract_strided_slice %132 {offsets = [0, 0], sizes = [32, 1], strides = [1, 1]} : vector<32x2xf32> to vector<32x1xf32>
    %134 = vector.extract_strided_slice %132 {offsets = [0, 1], sizes = [32, 1], strides = [1, 1]} : vector<32x2xf32> to vector<32x1xf32>
    %cst_65 = arith.constant dense<0.000000e+00> : vector<128xf32>
    %135 = vector.multi_reduction <add>, %122, %cst_65 [0] : vector<32x128xf32> to vector<128xf32>
    %136 = vector.shape_cast %135 : vector<128xf32> to vector<1x128xf32>
    %cst_66 = arith.constant 3.200000e+01 : f32
    %137 = vector.broadcast %cst_66 : f32 to vector<1x128xf32>
    %138 = arith.divf %136, %137 : vector<1x128xf32>
    %139 = vector.broadcast %138 : vector<1x128xf32> to vector<32x128xf32>
    %140 = arith.subf %122, %139 : vector<32x128xf32>
    %141 = arith.mulf %140, %140 : vector<32x128xf32>
    %cst_67 = arith.constant dense<0.000000e+00> : vector<128xf32>
    %142 = vector.multi_reduction <add>, %141, %cst_67 [0] : vector<32x128xf32> to vector<128xf32>
    %143 = vector.shape_cast %142 : vector<128xf32> to vector<1x128xf32>
    %cst_68 = arith.constant 3.200000e+01 : f32
    %144 = vector.broadcast %cst_68 : f32 to vector<1x128xf32>
    %145 = arith.divf %143, %144 : vector<1x128xf32>
    %cst_69 = arith.constant 9.99999974E-6 : f32
    %146 = vector.broadcast %cst_69 : f32 to vector<1x128xf32>
    %147 = arith.addf %145, %146 : vector<1x128xf32>
    %148 = math.rsqrt %147 : vector<1x128xf32>
    %149 = vector.broadcast %148 : vector<1x128xf32> to vector<32x128xf32>
    %150 = arith.mulf %140, %149 : vector<32x128xf32>
    %151 = vector.broadcast %133 : vector<32x1xf32> to vector<32x128xf32>
    %152 = arith.mulf %150, %151 : vector<32x128xf32>
    %153 = vector.broadcast %134 : vector<32x1xf32> to vector<32x128xf32>
    %154 = arith.addf %152, %153 : vector<32x128xf32>
    %c0_70 = arith.constant 0 : index
    %c0_71 = arith.constant 0 : index
    %155 = vector.load %arg15[%c0_70, %c0_71] : memref<32x128xf32, #tpu.memory_space<vmem>>, vector<32x128xf32>
    tpu.vector_store %arg15[%c0_70, %c0_71], %154 {strides = array<i32>} : memref<32x128xf32, #tpu.memory_space<vmem>>, vector<32x128xf32>,
    %156 = arith.mulf %125, %125 : vector<8x128xf32>
    %157 = arith.mulf %128, %128 : vector<8x128xf32>
    %158 = arith.addf %156, %157 : vector<8x128xf32>
    %159 = arith.mulf %131, %131 : vector<8x128xf32>
    %160 = arith.addf %158, %159 : vector<8x128xf32>
    %cst_72 = arith.constant dense<0.000000e+00> : vector<128xf32>
    %161 = vector.multi_reduction <add>, %160, %cst_72 [0] : vector<8x128xf32> to vector<128xf32>
    %162 = vector.shape_cast %161 : vector<128xf32> to vector<1x128xf32>
    %cst_73 = arith.constant 0.000000e+00 : f32
    %163 = vector.broadcast %cst_73 : f32 to vector<1x128xf32>
    %164 = arith.cmpf ogt, %162, %163 : vector<1x128xf32>
    %cst_74 = arith.constant 8.000000e+00 : f32
    %165 = math.sqrt %cst_74 : f32
    %166 = math.rsqrt %162 : vector<1x128xf32>
    %167 = vector.broadcast %165 : f32 to vector<1x128xf32>
    %168 = arith.mulf %167, %166 : vector<1x128xf32>
    %cst_75 = arith.constant 1.000000e+00 : f32
    %169 = vector.broadcast %cst_75 : f32 to vector<1x128xf32>
    %170 = arith.select %164, %168, %169 : vector<1x128xi1>, vector<1x128xf32>
    %171 = vector.broadcast %170 : vector<1x128xf32> to vector<8x128xf32>
    %172 = arith.mulf %125, %171 : vector<8x128xf32>
    %c0_76 = arith.constant 0 : index
    %c0_77 = arith.constant 0 : index
    %c0_78 = arith.constant 0 : index
    %173 = vector.load %arg16[%c0_76, %c0_77, %c0_78] : memref<3x8x128xf32, #tpu.memory_space<vmem>>, vector<1x8x128xf32>
    %174 = vector.shape_cast %173 : vector<1x8x128xf32> to vector<8x128xf32>
    %175 = vector.shape_cast %172 : vector<8x128xf32> to vector<1x8x128xf32>
    tpu.vector_store %arg16[%c0_76, %c0_77, %c0_78], %175 {strides = array<i32>} : memref<3x8x128xf32, #tpu.memory_space<vmem>>, vector<1x8x128xf32>,
    %176 = vector.broadcast %170 : vector<1x128xf32> to vector<8x128xf32>
    %177 = arith.mulf %128, %176 : vector<8x128xf32>
    %c1_79 = arith.constant 1 : index
    %c0_80 = arith.constant 0 : index
    %c0_81 = arith.constant 0 : index
    %178 = vector.load %arg16[%c1_79, %c0_80, %c0_81] : memref<3x8x128xf32, #tpu.memory_space<vmem>>, vector<1x8x128xf32>
    %179 = vector.shape_cast %178 : vector<1x8x128xf32> to vector<8x128xf32>
    %180 = vector.shape_cast %177 : vector<8x128xf32> to vector<1x8x128xf32>
    tpu.vector_store %arg16[%c1_79, %c0_80, %c0_81], %180 {strides = array<i32>} : memref<3x8x128xf32, #tpu.memory_space<vmem>>, vector<1x8x128xf32>,
    %181 = vector.broadcast %170 : vector<1x128xf32> to vector<8x128xf32>
    %182 = arith.mulf %131, %181 : vector<8x128xf32>
    %c2_82 = arith.constant 2 : index
    %c0_83 = arith.constant 0 : index
    %c0_84 = arith.constant 0 : index
    %183 = vector.load %arg16[%c2_82, %c0_83, %c0_84] : memref<3x8x128xf32, #tpu.memory_space<vmem>>, vector<1x8x128xf32>
    %184 = vector.shape_cast %183 : vector<1x8x128xf32> to vector<8x128xf32>
    %185 = vector.shape_cast %182 : vector<8x128xf32> to vector<1x8x128xf32>
    tpu.vector_store %arg16[%c2_82, %c0_83, %c0_84], %185 {strides = array<i32>} : memref<3x8x128xf32, #tpu.memory_space<vmem>>, vector<1x8x128xf32>,
    return
  }
  func.func @transform_0(%arg0: i32) -> (i32, i32) {
    %c0_i32 = arith.constant 0 : i32
    %c0_i32_0 = arith.constant 0 : i32
    return %c0_i32, %arg0 : i32, i32
  }
  func.func @transform_1(%arg0: i32) -> (i32, i32, i32) {
    %c0_i32 = arith.constant 0 : i32
    %c0_i32_0 = arith.constant 0 : i32
    %c0_i32_1 = arith.constant 0 : i32
    return %c0_i32, %c0_i32_0, %arg0 : i32, i32, i32
  }
  func.func @transform_2(%arg0: i32) -> (i32, i32) {
    %c0_i32 = arith.constant 0 : i32
    %c0_i32_0 = arith.constant 0 : i32
    return %c0_i32, %arg0 : i32, i32
  }
  func.func @transform_3(%arg0: i32) -> (i32, i32, i32) {
    %c0_i32 = arith.constant 0 : i32
    %c0_i32_0 = arith.constant 0 : i32
    %c0_i32_1 = arith.constant 0 : i32
    return %c0_i32, %c0_i32_0, %arg0 : i32, i32, i32
  }
  func.func @transform_4(%arg0: i32) -> (i32, i32) {
    %c0_i32 = arith.constant 0 : i32
    %c0_i32_0 = arith.constant 0 : i32
    %c0_i32_1 = arith.constant 0 : i32
    return %c0_i32, %c0_i32_0 : i32, i32
  }
  func.func @transform_5(%arg0: i32) -> (i32, i32) {
    %c0_i32 = arith.constant 0 : i32
    %c0_i32_0 = arith.constant 0 : i32
    %c0_i32_1 = arith.constant 0 : i32
    return %c0_i32, %c0_i32_0 : i32, i32
  }
  func.func @transform_6(%arg0: i32) -> (i32, i32) {
    %c0_i32 = arith.constant 0 : i32
    %c0_i32_0 = arith.constant 0 : i32
    %c0_i32_1 = arith.constant 0 : i32
    return %c0_i32, %c0_i32_0 : i32, i32
  }
  func.func @transform_7(%arg0: i32) -> (i32, i32) {
    %c0_i32 = arith.constant 0 : i32
    %c0_i32_0 = arith.constant 0 : i32
    %c0_i32_1 = arith.constant 0 : i32
    return %c0_i32, %c0_i32_0 : i32, i32
  }
  func.func @transform_8(%arg0: i32) -> (i32, i32) {
    %c0_i32 = arith.constant 0 : i32
    %c0_i32_0 = arith.constant 0 : i32
    %c0_i32_1 = arith.constant 0 : i32
    return %c0_i32, %c0_i32_0 : i32, i32
  }
  func.func @transform_9(%arg0: i32) -> (i32, i32) {
    %c0_i32 = arith.constant 0 : i32
    %c0_i32_0 = arith.constant 0 : i32
    %c0_i32_1 = arith.constant 0 : i32
    return %c0_i32, %c0_i32_0 : i32, i32
  }
  func.func @transform_10(%arg0: i32) -> (i32, i32) {
    %c0_i32 = arith.constant 0 : i32
    %c0_i32_0 = arith.constant 0 : i32
    %c0_i32_1 = arith.constant 0 : i32
    return %c0_i32, %c0_i32_0 : i32, i32
  }
  func.func @transform_11(%arg0: i32) -> (i32, i32) {
    %c0_i32 = arith.constant 0 : i32
    %c0_i32_0 = arith.constant 0 : i32
    %c0_i32_1 = arith.constant 0 : i32
    return %c0_i32, %c0_i32_0 : i32, i32
  }
  func.func @transform_12(%arg0: i32) -> (i32, i32) {
    %c0_i32 = arith.constant 0 : i32
    %c0_i32_0 = arith.constant 0 : i32
    %c0_i32_1 = arith.constant 0 : i32
    return %c0_i32, %c0_i32_0 : i32, i32
  }
  func.func @transform_13(%arg0: i32) -> (i32, i32) {
    %c0_i32 = arith.constant 0 : i32
    %c0_i32_0 = arith.constant 0 : i32
    %c0_i32_1 = arith.constant 0 : i32
    return %c0_i32, %c0_i32_0 : i32, i32
  }
  func.func @transform_14(%arg0: i32) -> (i32, i32) {
    %c0_i32 = arith.constant 0 : i32
    %c0_i32_0 = arith.constant 0 : i32
    return %c0_i32, %arg0 : i32, i32
  }
  func.func @transform_15(%arg0: i32) -> (i32, i32, i32) {
    %c0_i32 = arith.constant 0 : i32
    %c0_i32_0 = arith.constant 0 : i32
    %c0_i32_1 = arith.constant 0 : i32
    return %c0_i32, %c0_i32_0, %arg0 : i32, i32, i32
  }
}

</mosaic_0001>

<llo_original>
// kernel: tpu_custom_call.1
$region0: #{tpu_custom_call.1}
  #allocation0 [shape = 'u32[]', space=smem, size = 0x4, offset = 0x4, fixed_abs, tag = 'smem constant byte address 0x4 - core index']
  #allocation1 [shape = 'u32[144,128]{1,0:T(1,128)}', space=vmem, size = 0x12000, scoped, tag = 'internal scratch']
  %s0 = inlined_call_operand.vmem [shape: f32[32,256], index: 0, kind: input, shape index: {}]
  %s1 = inlined_call_operand.vmem [shape: f32[3,8,256], index: 1, kind: input, shape index: {}]
  %s2 = inlined_call_operand.vmem [shape: f32[16,256], index: 2, kind: input, shape index: {}]
  %s3 = inlined_call_operand.vmem [shape: f32[3,8,256], index: 3, kind: input, shape index: {}]
  %s4 = inlined_call_operand.vmem [shape: f32[16,2], index: 4, kind: input, shape index: {}]
  %s5 = inlined_call_operand.vmem [shape: f32[32,2], index: 5, kind: input, shape index: {}]
  %s6 = inlined_call_operand.vmem [shape: f32[16,8], index: 6, kind: input, shape index: {}]
  %s7 = inlined_call_operand.vmem [shape: f32[40,16], index: 7, kind: input, shape index: {}]
  %s8 = inlined_call_operand.vmem [shape: f32[40,16], index: 8, kind: input, shape index: {}]
  %s9 = inlined_call_operand.vmem [shape: f32[40,1], index: 9, kind: input, shape index: {}]
  %s10 = inlined_call_operand.vmem [shape: f32[16,8], index: 10, kind: input, shape index: {}]
  %s11 = inlined_call_operand.vmem [shape: f32[40,32], index: 11, kind: input, shape index: {}]
  %s12 = inlined_call_operand.vmem [shape: f32[40,16], index: 12, kind: input, shape index: {}]
  %s13 = inlined_call_operand.vmem [shape: f32[40,1], index: 13, kind: input, shape index: {}]
  %s14 = inlined_call_operand.hbm [shape: f32[32,256], index: 14, kind: output, shape index: {0}]
  %s15 = inlined_call_operand.hbm [shape: f32[3,8,256], index: 15, kind: output, shape index: {1}]
  %16 = xla_tuple %s14, %s15
  %s17 = sld [smem:[#allocation0]]
  $region249: #{tpu_custom_call.1} parent=0
    _
  %s19 = ssub.s32 1, %s17
  %s20 = scalar_select 0, %s19, %s17
  $region1: #{tpu_custom_call.1} parent=0
    #allocation2 [shape = 'u8[32768]{0}', space=vmem, size = 0x8000, scoped, tag = 'input window, operand 0']
    #allocation3 [shape = 'u8[24576]{0}', space=vmem, size = 0x6000, scoped, tag = 'input window, operand 1']
    #allocation4 [shape = 'u8[16384]{0}', space=vmem, size = 0x4000, scoped, tag = 'input window, operand 2']
    #allocation5 [shape = 'u8[24576]{0}', space=vmem, size = 0x6000, scoped, tag = 'input window, operand 3']
    #allocation6 [shape = 'u8[32768]{0}', space=vmem, size = 0x8000, scoped, tag = 'output window, operand 0']
    #allocation7 [shape = 's32[2]{0}', space=sflag, size = 0x8, scoped, tag = 'scoped memory for tpu_custom_call.1']
    #allocation8 [shape = 'u8[24576]{0}', space=vmem, size = 0x6000, scoped, tag = 'output window, operand 1']
    #allocation9 [shape = 's32[2]{0}', space=sflag, size = 0x8, scoped, tag = 'scoped memory for tpu_custom_call.1']
    %21 = vsyncpa [#allocation7], 0
    %s22 = scalar_lea.sflag [#allocation7], 1
    %23 = vsyncpa %s22, 0
    %24 = vsyncpa [#allocation9], 0
    %s25 = scalar_lea.sflag [#allocation9], 1
    %26 = vsyncpa %s25, 0
    loop: start=0, step=1, limit=4
    $region2: #{tpu_custom_call.1} parent=1 // loop_pre_header
      _
    $region3: #{tpu_custom_call.1} parent=1 // loop_header
      %s28 = sphi 0, %s32
      %p29 = scmp.ge.s32.totalorder %s28, 4
      %s38 = sphi 0, %s40
      %s41 = sphi 0, %s38
      %s42 = sphi 0, %s41
      %s58 = sphi 0, %s42
      %s64 = sphi 0, %s66
      %s67 = sphi 0, %s64
      %s68 = sphi 0, %s67
      %s84 = sphi 0, %s68
      %s90 = sphi 0, %s92
      %s93 = sphi 0, %s90
      %s94 = sphi 0, %s93
      %s110 = sphi 0, %s94
      %s116 = sphi 0, %s118
      %s119 = sphi 0, %s116
      %s120 = sphi 0, %s119
      %s136 = sphi 0, %s120
      %s140 = sphi 0, %s140
      %s142 = sphi 0, %s140
      %s143 = sphi 0, %s142
      %s157 = sphi 0, %s143
      %s161 = sphi 0, %s161
      %s163 = sphi 0, %s161
      %s164 = sphi 0, %s163
      %s178 = sphi 0, %s164
      %s182 = sphi 0, %s182
      %s184 = sphi 0, %s182
      %s185 = sphi 0, %s184
      %s199 = sphi 0, %s185
      %s203 = sphi 0, %s203
      %s205 = sphi 0, %s203
      %s206 = sphi 0, %s205
      %s220 = sphi 0, %s206
      %s224 = sphi 0, %s224
      %s226 = sphi 0, %s224
      %s227 = sphi 0, %s226
      %s241 = sphi 0, %s227
      %s245 = sphi 0, %s245
      %s247 = sphi 0, %s245
      %s248 = sphi 0, %s247
      %s262 = sphi 0, %s248
      %s266 = sphi 0, %s266
      %s268 = sphi 0, %s266
      %s269 = sphi 0, %s268
      %s283 = sphi 0, %s269
      %s287 = sphi 0, %s287
      %s289 = sphi 0, %s287
      %s290 = sphi 0, %s289
      %s304 = sphi 0, %s290
      %s308 = sphi 0, %s308
      %s310 = sphi 0, %s308
      %s311 = sphi 0, %s310
      %s325 = sphi 0, %s311
      %s329 = sphi 0, %s329
      %s331 = sphi 0, %s329
      %s332 = sphi 0, %s331
      %s346 = sphi 0, %s332
      %s352 = sphi 0, %s354
      %s355 = sphi 0, %s352
      %s356 = sphi 0, %s355
      %s372 = sphi 0, %s356
      %s378 = sphi 0, %s380
      %s381 = sphi 0, %s378
      %s382 = sphi 0, %s381
      %s398 = sphi 0, %s382
    $region4: #{tpu_custom_call.1} parent=1 // loop_header_branch
      %31 = sbr.rel (%p29) target = $region8
    $region5: #{tpu_custom_call.1} parent=1 // loop_body
      %s33 = ssub.s32 %s28, 1
      %s34 = ssub.s32 %s28, 2
      %s35 = sadd.s32 %s28, 1
      %s36 = ssub.s32 %s28, %s35
      %p37 = scmp.eq.s32.totalorder %s36, 0
      %s39 = sadd.s32 %s38, 1
      %s40 = scalar_select %p37, %s38, %s39
      %p43 = pneg %p37
      %p44 = scmp.eq.s32.totalorder %s28, 1
      %p45 = por %p43, %p44
      %p46 = scmp.ne.s32.totalorder %s38, %s41
      %p47 = scmp.eq.s32.totalorder %s28, 0
      %p48 = por %p46, %p47
      %p49 = scmp.ne.s32.totalorder %s38, %s41
      %p50 = scmp.eq.s32.totalorder %s33, 1
      %p51 = por %p49, %p50
      %p52 = scmp.ne.s32.totalorder %s41, %s42
      %p53 = scmp.eq.s32.totalorder %s33, 0
      %p54 = por %p52, %p53
      %p55 = scmp.ne.s32.totalorder %s41, %s42
      %p56 = scmp.eq.s32.totalorder %s34, 1
      %p57 = por %p55, %p56
      %p59 = scmp.ne.s32.totalorder %s42, %s58
      %p60 = scmp.eq.s32.totalorder %s34, 0
      %p61 = por %p59, %p60
      %s62 = ssub.s32 %s28, %s35
      %p63 = scmp.eq.s32.totalorder %s62, 0
      %s65 = sadd.s32 %s64, 1
      %s66 = scalar_select %p63, %s64, %s65
      %p69 = pneg %p63
      %p70 = scmp.eq.s32.totalorder %s28, 1
      %p71 = por %p69, %p70
      %p72 = scmp.ne.s32.totalorder %s64, %s67
      %p73 = scmp.eq.s32.totalorder %s28, 0
      %p74 = por %p72, %p73
      %p75 = scmp.ne.s32.totalorder %s64, %s67
      %p76 = scmp.eq.s32.totalorder %s33, 1
      %p77 = por %p75, %p76
      %p78 = scmp.ne.s32.totalorder %s67, %s68
      %p79 = scmp.eq.s32.totalorder %s33, 0
      %p80 = por %p78, %p79
      %p81 = scmp.ne.s32.totalorder %s67, %s68
      %p82 = scmp.eq.s32.totalorder %s34, 1
      %p83 = por %p81, %p82
      %p85 = scmp.ne.s32.totalorder %s68, %s84
      %p86 = scmp.eq.s32.totalorder %s34, 0
      %p87 = por %p85, %p86
      %s88 = ssub.s32 %s28, %s35
      %p89 = scmp.eq.s32.totalorder %s88, 0
      %s91 = sadd.s32 %s90, 1
      %s92 = scalar_select %p89, %s90, %s91
      %p95 = pneg %p89
      %p96 = scmp.eq.s32.totalorder %s28, 1
      %p97 = por %p95, %p96
      %p98 = scmp.ne.s32.totalorder %s90, %s93
      %p99 = scmp.eq.s32.totalorder %s28, 0
      %p100 = por %p98, %p99
      %p101 = scmp.ne.s32.totalorder %s90, %s93
      %p102 = scmp.eq.s32.totalorder %s33, 1
      %p103 = por %p101, %p102
      %p104 = scmp.ne.s32.totalorder %s93, %s94
      %p105 = scmp.eq.s32.totalorder %s33, 0
      %p106 = por %p104, %p105
      %p107 = scmp.ne.s32.totalorder %s93, %s94
      %p108 = scmp.eq.s32.totalorder %s34, 1
      %p109 = por %p107, %p108
      %p111 = scmp.ne.s32.totalorder %s94, %s110
      %p112 = scmp.eq.s32.totalorder %s34, 0
      %p113 = por %p111, %p112
      %s114 = ssub.s32 %s28, %s35
      %p115 = scmp.eq.s32.totalorder %s114, 0
      %s117 = sadd.s32 %s116, 1
      %s118 = scalar_select %p115, %s116, %s117
      %p121 = pneg %p115
      %p122 = scmp.eq.s32.totalorder %s28, 1
      %p123 = por %p121, %p122
      %p124 = scmp.ne.s32.totalorder %s116, %s119
      %p125 = scmp.eq.s32.totalorder %s28, 0
      %p126 = por %p124, %p125
      %p127 = scmp.ne.s32.totalorder %s116, %s119
      %p128 = scmp.eq.s32.totalorder %s33, 1
      %p129 = por %p127, %p128
      %p130 = scmp.ne.s32.totalorder %s119, %s120
      %p131 = scmp.eq.s32.totalorder %s33, 0
      %p132 = por %p130, %p131
      %p133 = scmp.ne.s32.totalorder %s119, %s120
      %p134 = scmp.eq.s32.totalorder %s34, 1
      %p135 = por %p133, %p134
      %p137 = scmp.ne.s32.totalorder %s120, %s136
      %p138 = scmp.eq.s32.totalorder %s34, 0
      %p139 = por %p137, %p138
      %s141 = sadd.s32 %s140, 1
      %p144 = scmp.eq.s32.totalorder %s28, 1
      %p145 = scmp.ne.s32.totalorder %s140, %s142
      %p146 = scmp.eq.s32.totalorder %s28, 0
      %p147 = por %p145, %p146
      %p148 = scmp.ne.s32.totalorder %s140, %s142
      %p149 = scmp.eq.s32.totalorder %s33, 1
      %p150 = por %p148, %p149
      %p151 = scmp.ne.s32.totalorder %s142, %s143
      %p152 = scmp.eq.s32.totalorder %s33, 0
      %p153 = por %p151, %p152
      %p154 = scmp.ne.s32.totalorder %s142, %s143
      %p155 = scmp.eq.s32.totalorder %s34, 1
      %p156 = por %p154, %p155
      %p158 = scmp.ne.s32.totalorder %s143, %s157
      %p159 = scmp.eq.s32.totalorder %s34, 0
      %p160 = por %p158, %p159
      %s162 = sadd.s32 %s161, 1
      %p165 = scmp.eq.s32.totalorder %s28, 1
      %p166 = scmp.ne.s32.totalorder %s161, %s163
      %p167 = scmp.eq.s32.totalorder %s28, 0
      %p168 = por %p166, %p167
      %p169 = scmp.ne.s32.totalorder %s161, %s163
      %p170 = scmp.eq.s32.totalorder %s33, 1
      %p171 = por %p169, %p170
      %p172 = scmp.ne.s32.totalorder %s163, %s164
      %p173 = scmp.eq.s32.totalorder %s33, 0
      %p174 = por %p172, %p173
      %p175 = scmp.ne.s32.totalorder %s163, %s164
      %p176 = scmp.eq.s32.totalorder %s34, 1
      %p177 = por %p175, %p176
      %p179 = scmp.ne.s32.totalorder %s164, %s178
      %p180 = scmp.eq.s32.totalorder %s34, 0
      %p181 = por %p179, %p180
      %s183 = sadd.s32 %s182, 1
      %p186 = scmp.eq.s32.totalorder %s28, 1
      %p187 = scmp.ne.s32.totalorder %s182, %s184
      %p188 = scmp.eq.s32.totalorder %s28, 0
      %p189 = por %p187, %p188
      %p190 = scmp.ne.s32.totalorder %s182, %s184
      %p191 = scmp.eq.s32.totalorder %s33, 1
      %p192 = por %p190, %p191
      %p193 = scmp.ne.s32.totalorder %s184, %s185
      %p194 = scmp.eq.s32.totalorder %s33, 0
      %p195 = por %p193, %p194
      %p196 = scmp.ne.s32.totalorder %s184, %s185
      %p197 = scmp.eq.s32.totalorder %s34, 1
      %p198 = por %p196, %p197
      %p200 = scmp.ne.s32.totalorder %s185, %s199
      %p201 = scmp.eq.s32.totalorder %s34, 0
      %p202 = por %p200, %p201
      %s204 = sadd.s32 %s203, 1
      %p207 = scmp.eq.s32.totalorder %s28, 1
      %p208 = scmp.ne.s32.totalorder %s203, %s205
      %p209 = scmp.eq.s32.totalorder %s28, 0
      %p210 = por %p208, %p209
      %p211 = scmp.ne.s32.totalorder %s203, %s205
      %p212 = scmp.eq.s32.totalorder %s33, 1
      %p213 = por %p211, %p212
      %p214 = scmp.ne.s32.totalorder %s205, %s206
      %p215 = scmp.eq.s32.totalorder %s33, 0
      %p216 = por %p214, %p215
      %p217 = scmp.ne.s32.totalorder %s205, %s206
      %p218 = scmp.eq.s32.totalorder %s34, 1
      %p219 = por %p217, %p218
      %p221 = scmp.ne.s32.totalorder %s206, %s220
      %p222 = scmp.eq.s32.totalorder %s34, 0
      %p223 = por %p221, %p222
      %s225 = sadd.s32 %s224, 1
      %p228 = scmp.eq.s32.totalorder %s28, 1
      %p229 = scmp.ne.s32.totalorder %s224, %s226
      %p230 = scmp.eq.s32.totalorder %s28, 0
      %p231 = por %p229, %p230
      %p232 = scmp.ne.s32.totalorder %s224, %s226
      %p233 = scmp.eq.s32.totalorder %s33, 1
      %p234 = por %p232, %p233
      %p235 = scmp.ne.s32.totalorder %s226, %s227
      %p236 = scmp.eq.s32.totalorder %s33, 0
      %p237 = por %p235, %p236
      %p238 = scmp.ne.s32.totalorder %s226, %s227
      %p239 = scmp.eq.s32.totalorder %s34, 1
      %p240 = por %p238, %p239
      %p242 = scmp.ne.s32.totalorder %s227, %s241
      %p243 = scmp.eq.s32.totalorder %s34, 0
      %p244 = por %p242, %p243
      %s246 = sadd.s32 %s245, 1
      %p249 = scmp.eq.s32.totalorder %s28, 1
      %p250 = scmp.ne.s32.totalorder %s245, %s247
      %p251 = scmp.eq.s32.totalorder %s28, 0
      %p252 = por %p250, %p251
      %p253 = scmp.ne.s32.totalorder %s245, %s247
      %p254 = scmp.eq.s32.totalorder %s33, 1
      %p255 = por %p253, %p254
      %p256 = scmp.ne.s32.totalorder %s247, %s248
      %p257 = scmp.eq.s32.totalorder %s33, 0
      %p258 = por %p256, %p257
      %p259 = scmp.ne.s32.totalorder %s247, %s248
      %p260 = scmp.eq.s32.totalorder %s34, 1
      %p261 = por %p259, %p260
      %p263 = scmp.ne.s32.totalorder %s248, %s262
      %p264 = scmp.eq.s32.totalorder %s34, 0
      %p265 = por %p263, %p264
      %s267 = sadd.s32 %s266, 1
      %p270 = scmp.eq.s32.totalorder %s28, 1
      %p271 = scmp.ne.s32.totalorder %s266, %s268
      %p272 = scmp.eq.s32.totalorder %s28, 0
      %p273 = por %p271, %p272
      %p274 = scmp.ne.s32.totalorder %s266, %s268
      %p275 = scmp.eq.s32.totalorder %s33, 1
      %p276 = por %p274, %p275
      %p277 = scmp.ne.s32.totalorder %s268, %s269
      %p278 = scmp.eq.s32.totalorder %s33, 0
      %p279 = por %p277, %p278
      %p280 = scmp.ne.s32.totalorder %s268, %s269
      %p281 = scmp.eq.s32.totalorder %s34, 1
      %p282 = por %p280, %p281
      %p284 = scmp.ne.s32.totalorder %s269, %s283
      %p285 = scmp.eq.s32.totalorder %s34, 0
      %p286 = por %p284, %p285
      %s288 = sadd.s32 %s287, 1
      %p291 = scmp.eq.s32.totalorder %s28, 1
      %p292 = scmp.ne.s32.totalorder %s287, %s289
      %p293 = scmp.eq.s32.totalorder %s28, 0
      %p294 = por %p292, %p293
      %p295 = scmp.ne.s32.totalorder %s287, %s289
      %p296 = scmp.eq.s32.totalorder %s33, 1
      %p297 = por %p295, %p296
      %p298 = scmp.ne.s32.totalorder %s289, %s290
      %p299 = scmp.eq.s32.totalorder %s33, 0
      %p300 = por %p298, %p299
      %p301 = scmp.ne.s32.totalorder %s289, %s290
      %p302 = scmp.eq.s32.totalorder %s34, 1
      %p303 = por %p301, %p302
      %p305 = scmp.ne.s32.totalorder %s290, %s304
      %p306 = scmp.eq.s32.totalorder %s34, 0
      %p307 = por %p305, %p306
      %s309 = sadd.s32 %s308, 1
      %p312 = scmp.eq.s32.totalorder %s28, 1
      %p313 = scmp.ne.s32.totalorder %s308, %s310
      %p314 = scmp.eq.s32.totalorder %s28, 0
      %p315 = por %p313, %p314
      %p316 = scmp.ne.s32.totalorder %s308, %s310
      %p317 = scmp.eq.s32.totalorder %s33, 1
      %p318 = por %p316, %p317
      %p319 = scmp.ne.s32.totalorder %s310, %s311
      %p320 = scmp.eq.s32.totalorder %s33, 0
      %p321 = por %p319, %p320
      %p322 = scmp.ne.s32.totalorder %s310, %s311
      %p323 = scmp.eq.s32.totalorder %s34, 1
      %p324 = por %p322, %p323
      %p326 = scmp.ne.s32.totalorder %s311, %s325
      %p327 = scmp.eq.s32.totalorder %s34, 0
      %p328 = por %p326, %p327
      %s330 = sadd.s32 %s329, 1
      %p333 = scmp.eq.s32.totalorder %s28, 1
      %p334 = scmp.ne.s32.totalorder %s329, %s331
      %p335 = scmp.eq.s32.totalorder %s28, 0
      %p336 = por %p334, %p335
      %p337 = scmp.ne.s32.totalorder %s329, %s331
      %p338 = scmp.eq.s32.totalorder %s33, 1
      %p339 = por %p337, %p338
      %p340 = scmp.ne.s32.totalorder %s331, %s332
      %p341 = scmp.eq.s32.totalorder %s33, 0
      %p342 = por %p340, %p341
      %p343 = scmp.ne.s32.totalorder %s331, %s332
      %p344 = scmp.eq.s32.totalorder %s34, 1
      %p345 = por %p343, %p344
      %p347 = scmp.ne.s32.totalorder %s332, %s346
      %p348 = scmp.eq.s32.totalorder %s34, 0
      %p349 = por %p347, %p348
      %s350 = ssub.s32 %s28, %s35
      %p351 = scmp.eq.s32.totalorder %s350, 0
      %s353 = sadd.s32 %s352, 1
      %s354 = scalar_select %p351, %s352, %s353
      %p357 = pneg %p351
      %p358 = scmp.eq.s32.totalorder %s28, 1
      %p359 = por %p357, %p358
      %p360 = scmp.ne.s32.totalorder %s352, %s355
      %p361 = scmp.eq.s32.totalorder %s28, 0
      %p362 = por %p360, %p361
      %p363 = scmp.ne.s32.totalorder %s352, %s355
      %p364 = scmp.eq.s32.totalorder %s33, 1
      %p365 = por %p363, %p364
      %p366 = scmp.ne.s32.totalorder %s355, %s356
      %p367 = scmp.eq.s32.totalorder %s33, 0
      %p368 = por %p366, %p367
      %p369 = scmp.ne.s32.totalorder %s355, %s356
      %p370 = scmp.eq.s32.totalorder %s34, 1
      %p371 = por %p369, %p370
      %p373 = scmp.ne.s32.totalorder %s356, %s372
      %p374 = scmp.eq.s32.totalorder %s34, 0
      %p375 = por %p373, %p374
      %s376 = ssub.s32 %s28, %s35
      %p377 = scmp.eq.s32.totalorder %s376, 0
      %s379 = sadd.s32 %s378, 1
      %s380 = scalar_select %p377, %s378, %s379
      %p383 = pneg %p377
      %p384 = scmp.eq.s32.totalorder %s28, 1
      %p385 = por %p383, %p384
      %p386 = scmp.ne.s32.totalorder %s378, %s381
      %p387 = scmp.eq.s32.totalorder %s28, 0
      %p388 = por %p386, %p387
      %p389 = scmp.ne.s32.totalorder %s378, %s381
      %p390 = scmp.eq.s32.totalorder %s33, 1
      %p391 = por %p389, %p390
      %p392 = scmp.ne.s32.totalorder %s381, %s382
      %p393 = scmp.eq.s32.totalorder %s33, 0
      %p394 = por %p392, %p393
      %p395 = scmp.ne.s32.totalorder %s381, %s382
      %p396 = scmp.eq.s32.totalorder %s34, 1
      %p397 = por %p395, %p396
      %p399 = scmp.ne.s32.totalorder %s382, %s398
      %p400 = scmp.eq.s32.totalorder %s34, 0
      %p401 = por %p399, %p400
      %p402 = scmp.le.s32.totalorder 1, %s28
      %p403 = scmp.lt.s32.totalorder %s28, 3
      %p404 = pnand %p402, %p403
      %p405 = pneg %p404
      // Predicated region
      $region9: #{tpu_custom_call.1} parent=5 // pred_check
        _
      $region10: #{tpu_custom_call.1} parent=5 // pred_check_branch
        %407 = sbr.rel (%p404) target = $region12
      $region11: #{tpu_custom_call.1} parent=5 // pred_region
        %s408 = ssub.s32 %s28, 1
        // Predicated region
        $region13: #{tpu_custom_call.1} parent=11 // pred_check
          %p409 = pneg %p153
        $region14: #{tpu_custom_call.1} parent=11 // pred_check_branch
          %411 = sbr.rel (%p409) target = $region16
        $region15: #{tpu_custom_call.1} parent=11 // pred_region
          _
        $region16: #{tpu_custom_call.1} parent=11 // pred_fallthru
          _
        // Predicated region
        $region17: #{tpu_custom_call.1} parent=11 // pred_check
          %p412 = pneg %p174
        $region18: #{tpu_custom_call.1} parent=11 // pred_check_branch
          %414 = sbr.rel (%p412) target = $region20
        $region19: #{tpu_custom_call.1} parent=11 // pred_region
          _
        $region20: #{tpu_custom_call.1} parent=11 // pred_fallthru
          _
        // Predicated region
        $region21: #{tpu_custom_call.1} parent=11 // pred_check
          %p415 = pneg %p195
        $region22: #{tpu_custom_call.1} parent=11 // pred_check_branch
          %417 = sbr.rel (%p415) target = $region24
        $region23: #{tpu_custom_call.1} parent=11 // pred_region
          _
        $region24: #{tpu_custom_call.1} parent=11 // pred_fallthru
          _
        // Predicated region
        $region25: #{tpu_custom_call.1} parent=11 // pred_check
          %p418 = pneg %p216
        $region26: #{tpu_custom_call.1} parent=11 // pred_check_branch
          %420 = sbr.rel (%p418) target = $region28
        $region27: #{tpu_custom_call.1} parent=11 // pred_region
          _
        $region28: #{tpu_custom_call.1} parent=11 // pred_fallthru
          _
        // Predicated region
        $region29: #{tpu_custom_call.1} parent=11 // pred_check
          %p421 = pneg %p237
        $region30: #{tpu_custom_call.1} parent=11 // pred_check_branch
          %423 = sbr.rel (%p421) target = $region32
        $region31: #{tpu_custom_call.1} parent=11 // pred_region
          _
        $region32: #{tpu_custom_call.1} parent=11 // pred_fallthru
          _
        // Predicated region
        $region33: #{tpu_custom_call.1} parent=11 // pred_check
          %p424 = pneg %p258
        $region34: #{tpu_custom_call.1} parent=11 // pred_check_branch
          %426 = sbr.rel (%p424) target = $region36
        $region35: #{tpu_custom_call.1} parent=11 // pred_region
          _
        $region36: #{tpu_custom_call.1} parent=11 // pred_fallthru
          _
        // Predicated region
        $region37: #{tpu_custom_call.1} parent=11 // pred_check
          %p427 = pneg %p279
        $region38: #{tpu_custom_call.1} parent=11 // pred_check_branch
          %429 = sbr.rel (%p427) target = $region40
        $region39: #{tpu_custom_call.1} parent=11 // pred_region
          _
        $region40: #{tpu_custom_call.1} parent=11 // pred_fallthru
          _
        // Predicated region
        $region41: #{tpu_custom_call.1} parent=11 // pred_check
          %p430 = pneg %p300
        $region42: #{tpu_custom_call.1} parent=11 // pred_check_branch
          %432 = sbr.rel (%p430) target = $region44
        $region43: #{tpu_custom_call.1} parent=11 // pred_region
          _
        $region44: #{tpu_custom_call.1} parent=11 // pred_fallthru
          _
        // Predicated region
        $region45: #{tpu_custom_call.1} parent=11 // pred_check
          %p433 = pneg %p321
        $region46: #{tpu_custom_call.1} parent=11 // pred_check_branch
          %435 = sbr.rel (%p433) target = $region48
        $region47: #{tpu_custom_call.1} parent=11 // pred_region
          _
        $region48: #{tpu_custom_call.1} parent=11 // pred_fallthru
          _
        // Predicated region
        $region49: #{tpu_custom_call.1} parent=11 // pred_check
          %p436 = pneg %p342
        $region50: #{tpu_custom_call.1} parent=11 // pred_check_branch
          %438 = sbr.rel (%p436) target = $region52
        $region51: #{tpu_custom_call.1} parent=11 // pred_region
          _
        $region52: #{tpu_custom_call.1} parent=11 // pred_fallthru
          _
      $region12: #{tpu_custom_call.1} parent=5 // pred_fallthru
        _
      %p439 = scmp.lt.s32.totalorder %s28, 2
      // Predicated region
      $region53: #{tpu_custom_call.1} parent=5 // pred_check
        %p440 = pneg %p439
      $region54: #{tpu_custom_call.1} parent=5 // pred_check_branch
        %442 = sbr.rel (%p440) target = $region56
      $region55: #{tpu_custom_call.1} parent=5 // pred_region
        // Predicated region
        $region57: #{tpu_custom_call.1} parent=55 // pred_check
          %p443 = pneg %p48
        $region58: #{tpu_custom_call.1} parent=55 // pred_check_branch
          %445 = sbr.rel (%p443) target = $region60
        $region59: #{tpu_custom_call.1} parent=55 // pred_region
          %s446 = sand.u32 %s38, 1
          %s447 = sand.u32 %s38, 1
          %s448 = smul.addr %s447, 32
          %s449 = scalar_lea.vmem [#allocation2], %s448
          %s450 = smul.addr %s28, 8
          %s451 = scalar_lea.vmem %s0, %s450
          // Predicated region
          $region61: #{tpu_custom_call.1} parent=59 // pred_check
            _
          $region62: #{tpu_custom_call.1} parent=59 // pred_check_branch
            %453 = sbr.rel (0) target = $region64
          $region63: #{tpu_custom_call.1} parent=59 // pred_region
            // Predicated region
            $region65: #{tpu_custom_call.1} parent=63 // pred_check
              _
            $region66: #{tpu_custom_call.1} parent=63 // pred_check_branch
              %455 = sbr.rel (0) target = $region68
            $region67: #{tpu_custom_call.1} parent=63 // pred_region
              // Predicated region
              $region80: #{tpu_custom_call.1} parent=67 // pred_check
                _
              $region81: #{tpu_custom_call.1} parent=67 // pred_check_branch
                %477 = sbr.rel (0) target = $region83
              $region82: #{tpu_custom_call.1} parent=67 // pred_region
                loop: start=0, step=1, limit=1
                $region84: #{tpu_custom_call.1} parent=82 // loop_pre_header
                  _
                $region85: #{tpu_custom_call.1} parent=82 // loop_header
                  %s479 = sphi 0, %s483
                  %p480 = scmp.ge.s32.totalorder %s479, 1
                  %s484 = sphi %s451, %s451
                  %s485 = sphi %s449, %s449
                $region86: #{tpu_custom_call.1} parent=82 // loop_header_branch
                  %482 = sbr.rel (%p480) target = $region90
                $region87: #{tpu_custom_call.1} parent=82 // loop_body
                  %v486 = vld [vmem:[%s484] sm:$0xff]
                  %487 = vst [vmem:[%s485] sm:$0xff] %v486
                  %v488 = vld [vmem:[%s484 + $0x10] sm:$0xff]
                  %489 = vst [vmem:[%s485 + $0x8] sm:$0xff] %v488
                  %v490 = vld [vmem:[%s484 + $0x20] sm:$0xff]
                  %491 = vst [vmem:[%s485 + $0x10] sm:$0xff] %v490
                  %v492 = vld [vmem:[%s484 + $0x30] sm:$0xff]
                  %493 = vst [vmem:[%s485 + $0x18] sm:$0xff] %v492
                $region88: #{tpu_custom_call.1} parent=82 // loop_footer
                  %s483 = sadd.s32 1, %s479
                $region89: #{tpu_custom_call.1} parent=82 // loop_footer_branch
                  %478 = sbr.rel target = $region85
                $region90: #{tpu_custom_call.1} parent=82 // loop_exit
                  _
              $region83: #{tpu_custom_call.1} parent=67 // pred_fallthru
                _
              // Predicated region
              $region91: #{tpu_custom_call.1} parent=67 // pred_check
                _
              $region92: #{tpu_custom_call.1} parent=67 // pred_check_branch
                %495 = sbr.rel target = $region94
              $region93: #{tpu_custom_call.1} parent=67 // pred_region
                _
              $region94: #{tpu_custom_call.1} parent=67 // pred_fallthru
                _
            $region68: #{tpu_custom_call.1} parent=63 // pred_fallthru
              _
            // Predicated region
            $region69: #{tpu_custom_call.1} parent=63 // pred_check
              _
            $region70: #{tpu_custom_call.1} parent=63 // pred_check_branch
              %457 = sbr.rel target = $region72
            $region71: #{tpu_custom_call.1} parent=63 // pred_region
              %s459 = ssub.s32 256, 1
              loop: start=0, step=1, limit=1
              $region73: #{tpu_custom_call.1} parent=71 // loop_pre_header
                _
              $region74: #{tpu_custom_call.1} parent=71 // loop_header
                %s461 = sphi 0, %s465
                %p462 = scmp.ge.s32.totalorder %s461, 1
                %s466 = sphi %s451, %s451
                %s467 = sphi %s449, %s449
              $region75: #{tpu_custom_call.1} parent=71 // loop_header_branch
                %464 = sbr.rel (%p462) target = $region79
              $region76: #{tpu_custom_call.1} parent=71 // loop_body
                %v468 = vld [vmem:[%s466] sm:%s459]
                %469 = vst [vmem:[%s467] sm:%s459] %v468
                %v470 = vld [vmem:[%s466 + $0x10] sm:%s459]
                %471 = vst [vmem:[%s467 + $0x8] sm:%s459] %v470
                %v472 = vld [vmem:[%s466 + $0x20] sm:%s459]
                %473 = vst [vmem:[%s467 + $0x10] sm:%s459] %v472
                %v474 = vld [vmem:[%s466 + $0x30] sm:%s459]
                %475 = vst [vmem:[%s467 + $0x18] sm:%s459] %v474
              $region77: #{tpu_custom_call.1} parent=71 // loop_footer
                %s465 = sadd.s32 1, %s461
              $region78: #{tpu_custom_call.1} parent=71 // loop_footer_branch
                %460 = sbr.rel target = $region74
              $region79: #{tpu_custom_call.1} parent=71 // loop_exit
                _
            $region72: #{tpu_custom_call.1} parent=63 // pred_fallthru
              _
          $region64: #{tpu_custom_call.1} parent=59 // pred_fallthru
            _
          %496 = vnop
        $region60: #{tpu_custom_call.1} parent=55 // pred_fallthru
          _
        // Predicated region
        $region95: #{tpu_custom_call.1} parent=55 // pred_check
          %p497 = pneg %p74
        $region96: #{tpu_custom_call.1} parent=55 // pred_check_branch
          %499 = sbr.rel (%p497) target = $region98
        $region97: #{tpu_custom_call.1} parent=55 // pred_region
          %s500 = sand.u32 %s64, 1
          %s501 = sand.u32 %s64, 1
          %s502 = smul.addr %s501, 24
          %s503 = scalar_lea.vmem [#allocation3], %s502
          %s504 = smul.addr %s28, 8
          %s505 = scalar_lea.vmem %s1, %s504
          // Predicated region
          $region99: #{tpu_custom_call.1} parent=97 // pred_check
            _
          $region100: #{tpu_custom_call.1} parent=97 // pred_check_branch
            %507 = sbr.rel (0) target = $region102
          $region101: #{tpu_custom_call.1} parent=97 // pred_region
            // Predicated region
            $region103: #{tpu_custom_call.1} parent=101 // pred_check
              _
            $region104: #{tpu_custom_call.1} parent=101 // pred_check_branch
              %509 = sbr.rel (0) target = $region106
            $region105: #{tpu_custom_call.1} parent=101 // pred_region
              // Predicated region
              $region118: #{tpu_custom_call.1} parent=105 // pred_check
                _
              $region119: #{tpu_custom_call.1} parent=105 // pred_check_branch
                %529 = sbr.rel (0) target = $region121
              $region120: #{tpu_custom_call.1} parent=105 // pred_region
                loop: start=0, step=1, limit=1
                $region122: #{tpu_custom_call.1} parent=120 // loop_pre_header
                  _
                $region123: #{tpu_custom_call.1} parent=120 // loop_header
                  %s531 = sphi 0, %s535
                  %p532 = scmp.ge.s32.totalorder %s531, 1
                  %s536 = sphi %s505, %s505
                  %s537 = sphi %s503, %s503
                $region124: #{tpu_custom_call.1} parent=120 // loop_header_branch
                  %534 = sbr.rel (%p532) target = $region128
                $region125: #{tpu_custom_call.1} parent=120 // loop_body
                  %v538 = vld [vmem:[%s536] sm:$0xff]
                  %539 = vst [vmem:[%s537] sm:$0xff] %v538
                  %v540 = vld [vmem:[%s536 + $0x10] sm:$0xff]
                  %541 = vst [vmem:[%s537 + $0x8] sm:$0xff] %v540
                  %v542 = vld [vmem:[%s536 + $0x20] sm:$0xff]
                  %543 = vst [vmem:[%s537 + $0x10] sm:$0xff] %v542
                $region126: #{tpu_custom_call.1} parent=120 // loop_footer
                  %s535 = sadd.s32 1, %s531
                $region127: #{tpu_custom_call.1} parent=120 // loop_footer_branch
                  %530 = sbr.rel target = $region123
                $region128: #{tpu_custom_call.1} parent=120 // loop_exit
                  _
              $region121: #{tpu_custom_call.1} parent=105 // pred_fallthru
                _
              // Predicated region
              $region129: #{tpu_custom_call.1} parent=105 // pred_check
                _
              $region130: #{tpu_custom_call.1} parent=105 // pred_check_branch
                %545 = sbr.rel target = $region132
              $region131: #{tpu_custom_call.1} parent=105 // pred_region
                _
              $region132: #{tpu_custom_call.1} parent=105 // pred_fallthru
                _
            $region106: #{tpu_custom_call.1} parent=101 // pred_fallthru
              _
            // Predicated region
            $region107: #{tpu_custom_call.1} parent=101 // pred_check
              _
            $region108: #{tpu_custom_call.1} parent=101 // pred_check_branch
              %511 = sbr.rel target = $region110
            $region109: #{tpu_custom_call.1} parent=101 // pred_region
              %s513 = ssub.s32 256, 1
              loop: start=0, step=1, limit=1
              $region111: #{tpu_custom_call.1} parent=109 // loop_pre_header
                _
              $region112: #{tpu_custom_call.1} parent=109 // loop_header
                %s515 = sphi 0, %s519
                %p516 = scmp.ge.s32.totalorder %s515, 1
                %s520 = sphi %s505, %s505
                %s521 = sphi %s503, %s503
              $region113: #{tpu_custom_call.1} parent=109 // loop_header_branch
                %518 = sbr.rel (%p516) target = $region117
              $region114: #{tpu_custom_call.1} parent=109 // loop_body
                %v522 = vld [vmem:[%s520] sm:%s513]
                %523 = vst [vmem:[%s521] sm:%s513] %v522
                %v524 = vld [vmem:[%s520 + $0x10] sm:%s513]
                %525 = vst [vmem:[%s521 + $0x8] sm:%s513] %v524
                %v526 = vld [vmem:[%s520 + $0x20] sm:%s513]
                %527 = vst [vmem:[%s521 + $0x10] sm:%s513] %v526
              $region115: #{tpu_custom_call.1} parent=109 // loop_footer
                %s519 = sadd.s32 1, %s515
              $region116: #{tpu_custom_call.1} parent=109 // loop_footer_branch
                %514 = sbr.rel target = $region112
              $region117: #{tpu_custom_call.1} parent=109 // loop_exit
                _
            $region110: #{tpu_custom_call.1} parent=101 // pred_fallthru
              _
          $region102: #{tpu_custom_call.1} parent=97 // pred_fallthru
            _
          %546 = vnop
        $region98: #{tpu_custom_call.1} parent=55 // pred_fallthru
          _
        // Predicated region
        $region133: #{tpu_custom_call.1} parent=55 // pred_check
          %p547 = pneg %p100
        $region134: #{tpu_custom_call.1} parent=55 // pred_check_branch
          %549 = sbr.rel (%p547) target = $region136
        $region135: #{tpu_custom_call.1} parent=55 // pred_region
          %s550 = sand.u32 %s90, 1
          %s551 = sand.u32 %s90, 1
          %s552 = smul.addr %s551, 16
          %s553 = scalar_lea.vmem [#allocation4], %s552
          %s554 = smul.addr %s28, 8
          %s555 = scalar_lea.vmem %s2, %s554
          // Predicated region
          $region137: #{tpu_custom_call.1} parent=135 // pred_check
            _
          $region138: #{tpu_custom_call.1} parent=135 // pred_check_branch
            %557 = sbr.rel (0) target = $region140
          $region139: #{tpu_custom_call.1} parent=135 // pred_region
            // Predicated region
            $region141: #{tpu_custom_call.1} parent=139 // pred_check
              _
            $region142: #{tpu_custom_call.1} parent=139 // pred_check_branch
              %559 = sbr.rel (0) target = $region144
            $region143: #{tpu_custom_call.1} parent=139 // pred_region
              // Predicated region
              $region156: #{tpu_custom_call.1} parent=143 // pred_check
                _
              $region157: #{tpu_custom_call.1} parent=143 // pred_check_branch
                %577 = sbr.rel (0) target = $region159
              $region158: #{tpu_custom_call.1} parent=143 // pred_region
                loop: start=0, step=1, limit=1
                $region160: #{tpu_custom_call.1} parent=158 // loop_pre_header
                  _
                $region161: #{tpu_custom_call.1} parent=158 // loop_header
                  %s579 = sphi 0, %s583
                  %p580 = scmp.ge.s32.totalorder %s579, 1
                  %s584 = sphi %s555, %s555
                  %s585 = sphi %s553, %s553
                $region162: #{tpu_custom_call.1} parent=158 // loop_header_branch
                  %582 = sbr.rel (%p580) target = $region166
                $region163: #{tpu_custom_call.1} parent=158 // loop_body
                  %v586 = vld [vmem:[%s584] sm:$0xff]
                  %587 = vst [vmem:[%s585] sm:$0xff] %v586
                  %v588 = vld [vmem:[%s584 + $0x10] sm:$0xff]
                  %589 = vst [vmem:[%s585 + $0x8] sm:$0xff] %v588
                $region164: #{tpu_custom_call.1} parent=158 // loop_footer
                  %s583 = sadd.s32 1, %s579
                $region165: #{tpu_custom_call.1} parent=158 // loop_footer_branch
                  %578 = sbr.rel target = $region161
                $region166: #{tpu_custom_call.1} parent=158 // loop_exit
                  _
              $region159: #{tpu_custom_call.1} parent=143 // pred_fallthru
                _
              // Predicated region
              $region167: #{tpu_custom_call.1} parent=143 // pred_check
                _
              $region168: #{tpu_custom_call.1} parent=143 // pred_check_branch
                %591 = sbr.rel target = $region170
              $region169: #{tpu_custom_call.1} parent=143 // pred_region
                _
              $region170: #{tpu_custom_call.1} parent=143 // pred_fallthru
                _
            $region144: #{tpu_custom_call.1} parent=139 // pred_fallthru
              _
            // Predicated region
            $region145: #{tpu_custom_call.1} parent=139 // pred_check
              _
            $region146: #{tpu_custom_call.1} parent=139 // pred_check_branch
              %561 = sbr.rel target = $region148
            $region147: #{tpu_custom_call.1} parent=139 // pred_region
              %s563 = ssub.s32 256, 1
              loop: start=0, step=1, limit=1
              $region149: #{tpu_custom_call.1} parent=147 // loop_pre_header
                _
              $region150: #{tpu_custom_call.1} parent=147 // loop_header
                %s565 = sphi 0, %s569
                %p566 = scmp.ge.s32.totalorder %s565, 1
                %s570 = sphi %s555, %s555
                %s571 = sphi %s553, %s553
              $region151: #{tpu_custom_call.1} parent=147 // loop_header_branch
                %568 = sbr.rel (%p566) target = $region155
              $region152: #{tpu_custom_call.1} parent=147 // loop_body
                %v572 = vld [vmem:[%s570] sm:%s563]
                %573 = vst [vmem:[%s571] sm:%s563] %v572
                %v574 = vld [vmem:[%s570 + $0x10] sm:%s563]
                %575 = vst [vmem:[%s571 + $0x8] sm:%s563] %v574
              $region153: #{tpu_custom_call.1} parent=147 // loop_footer
                %s569 = sadd.s32 1, %s565
              $region154: #{tpu_custom_call.1} parent=147 // loop_footer_branch
                %564 = sbr.rel target = $region150
              $region155: #{tpu_custom_call.1} parent=147 // loop_exit
                _
            $region148: #{tpu_custom_call.1} parent=139 // pred_fallthru
              _
          $region140: #{tpu_custom_call.1} parent=135 // pred_fallthru
            _
          %592 = vnop
        $region136: #{tpu_custom_call.1} parent=55 // pred_fallthru
          _
        // Predicated region
        $region171: #{tpu_custom_call.1} parent=55 // pred_check
          %p593 = pneg %p126
        $region172: #{tpu_custom_call.1} parent=55 // pred_check_branch
          %595 = sbr.rel (%p593) target = $region174
        $region173: #{tpu_custom_call.1} parent=55 // pred_region
          %s596 = sand.u32 %s116, 1
          %s597 = sand.u32 %s116, 1
          %s598 = smul.addr %s597, 24
          %s599 = scalar_lea.vmem [#allocation5], %s598
          %s600 = smul.addr %s28, 8
          %s601 = scalar_lea.vmem %s3, %s600
          // Predicated region
          $region175: #{tpu_custom_call.1} parent=173 // pred_check
            _
          $region176: #{tpu_custom_call.1} parent=173 // pred_check_branch
            %603 = sbr.rel (0) target = $region178
          $region177: #{tpu_custom_call.1} parent=173 // pred_region
            // Predicated region
            $region179: #{tpu_custom_call.1} parent=177 // pred_check
              _
            $region180: #{tpu_custom_call.1} parent=177 // pred_check_branch
              %605 = sbr.rel (0) target = $region182
            $region181: #{tpu_custom_call.1} parent=177 // pred_region
              // Predicated region
              $region194: #{tpu_custom_call.1} parent=181 // pred_check
                _
              $region195: #{tpu_custom_call.1} parent=181 // pred_check_branch
                %625 = sbr.rel (0) target = $region197
              $region196: #{tpu_custom_call.1} parent=181 // pred_region
                loop: start=0, step=1, limit=1
                $region198: #{tpu_custom_call.1} parent=196 // loop_pre_header
                  _
                $region199: #{tpu_custom_call.1} parent=196 // loop_header
                  %s627 = sphi 0, %s631
                  %p628 = scmp.ge.s32.totalorder %s627, 1
                  %s632 = sphi %s601, %s601
                  %s633 = sphi %s599, %s599
                $region200: #{tpu_custom_call.1} parent=196 // loop_header_branch
                  %630 = sbr.rel (%p628) target = $region204
                $region201: #{tpu_custom_call.1} parent=196 // loop_body
                  %v634 = vld [vmem:[%s632] sm:$0xff]
                  %635 = vst [vmem:[%s633] sm:$0xff] %v634
                  %v636 = vld [vmem:[%s632 + $0x10] sm:$0xff]
                  %637 = vst [vmem:[%s633 + $0x8] sm:$0xff] %v636
                  %v638 = vld [vmem:[%s632 + $0x20] sm:$0xff]
                  %639 = vst [vmem:[%s633 + $0x10] sm:$0xff] %v638
                $region202: #{tpu_custom_call.1} parent=196 // loop_footer
                  %s631 = sadd.s32 1, %s627
                $region203: #{tpu_custom_call.1} parent=196 // loop_footer_branch
                  %626 = sbr.rel target = $region199
                $region204: #{tpu_custom_call.1} parent=196 // loop_exit
                  _
              $region197: #{tpu_custom_call.1} parent=181 // pred_fallthru
                _
              // Predicated region
              $region205: #{tpu_custom_call.1} parent=181 // pred_check
                _
              $region206: #{tpu_custom_call.1} parent=181 // pred_check_branch
                %641 = sbr.rel target = $region208
              $region207: #{tpu_custom_call.1} parent=181 // pred_region
                _
              $region208: #{tpu_custom_call.1} parent=181 // pred_fallthru
                _
            $region182: #{tpu_custom_call.1} parent=177 // pred_fallthru
              _
            // Predicated region
            $region183: #{tpu_custom_call.1} parent=177 // pred_check
              _
            $region184: #{tpu_custom_call.1} parent=177 // pred_check_branch
              %607 = sbr.rel target = $region186
            $region185: #{tpu_custom_call.1} parent=177 // pred_region
              %s609 = ssub.s32 256, 1
              loop: start=0, step=1, limit=1
              $region187: #{tpu_custom_call.1} parent=185 // loop_pre_header
                _
              $region188: #{tpu_custom_call.1} parent=185 // loop_header
                %s611 = sphi 0, %s615
                %p612 = scmp.ge.s32.totalorder %s611, 1
                %s616 = sphi %s601, %s601
                %s617 = sphi %s599, %s599
              $region189: #{tpu_custom_call.1} parent=185 // loop_header_branch
                %614 = sbr.rel (%p612) target = $region193
              $region190: #{tpu_custom_call.1} parent=185 // loop_body
                %v618 = vld [vmem:[%s616] sm:%s609]
                %619 = vst [vmem:[%s617] sm:%s609] %v618
                %v620 = vld [vmem:[%s616 + $0x10] sm:%s609]
                %621 = vst [vmem:[%s617 + $0x8] sm:%s609] %v620
                %v622 = vld [vmem:[%s616 + $0x20] sm:%s609]
                %623 = vst [vmem:[%s617 + $0x10] sm:%s609] %v622
              $region191: #{tpu_custom_call.1} parent=185 // loop_footer
                %s615 = sadd.s32 1, %s611
              $region192: #{tpu_custom_call.1} parent=185 // loop_footer_branch
                %610 = sbr.rel target = $region188
              $region193: #{tpu_custom_call.1} parent=185 // loop_exit
                _
            $region186: #{tpu_custom_call.1} parent=177 // pred_fallthru
              _
          $region178: #{tpu_custom_call.1} parent=173 // pred_fallthru
            _
          %642 = vnop
        $region174: #{tpu_custom_call.1} parent=55 // pred_fallthru
          _
      $region56: #{tpu_custom_call.1} parent=5 // pred_fallthru
        _
      %p643 = scmp.le.s32.totalorder 1, %s28
      %p644 = scmp.lt.s32.totalorder %s28, 3
      %p645 = pnand %p643, %p644
      %p646 = pneg %p645
      // Predicated region
      $region209: #{tpu_custom_call.1} parent=5 // pred_check
        _
      $region210: #{tpu_custom_call.1} parent=5 // pred_check_branch
        %648 = sbr.rel (%p645) target = $region212
      $region211: #{tpu_custom_call.1} parent=5 // pred_region
        %s649 = ssub.s32 %s28, 1
        %s650 = sand.u32 %s41, 1
        %s651 = sand.u32 %s41, 1
        %s652 = smul.addr %s651, 32
        %s653 = scalar_lea.vmem [#allocation2], %s652
        // Predicated region
        $region213: #{tpu_custom_call.1} parent=211 // pred_check
          %p654 = pneg %p54
        $region214: #{tpu_custom_call.1} parent=211 // pred_check_branch
          %656 = sbr.rel (%p654) target = $region216
        $region215: #{tpu_custom_call.1} parent=211 // pred_region
          _
        $region216: #{tpu_custom_call.1} parent=211 // pred_fallthru
          _
        %s657 = sand.u32 %s67, 1
        %s658 = sand.u32 %s67, 1
        %s659 = smul.addr %s658, 24
        %s660 = scalar_lea.vmem [#allocation3], %s659
        // Predicated region
        $region217: #{tpu_custom_call.1} parent=211 // pred_check
          %p661 = pneg %p80
        $region218: #{tpu_custom_call.1} parent=211 // pred_check_branch
          %663 = sbr.rel (%p661) target = $region220
        $region219: #{tpu_custom_call.1} parent=211 // pred_region
          _
        $region220: #{tpu_custom_call.1} parent=211 // pred_fallthru
          _
        %s664 = sand.u32 %s93, 1
        %s665 = sand.u32 %s93, 1
        %s666 = smul.addr %s665, 16
        %s667 = scalar_lea.vmem [#allocation4], %s666
        // Predicated region
        $region221: #{tpu_custom_call.1} parent=211 // pred_check
          %p668 = pneg %p106
        $region222: #{tpu_custom_call.1} parent=211 // pred_check_branch
          %670 = sbr.rel (%p668) target = $region224
        $region223: #{tpu_custom_call.1} parent=211 // pred_region
          _
        $region224: #{tpu_custom_call.1} parent=211 // pred_fallthru
          _
        %s671 = sand.u32 %s119, 1
        %s672 = sand.u32 %s119, 1
        %s673 = smul.addr %s672, 24
        %s674 = scalar_lea.vmem [#allocation5], %s673
        // Predicated region
        $region225: #{tpu_custom_call.1} parent=211 // pred_check
          %p675 = pneg %p132
        $region226: #{tpu_custom_call.1} parent=211 // pred_check_branch
          %677 = sbr.rel (%p675) target = $region228
        $region227: #{tpu_custom_call.1} parent=211 // pred_region
          _
        $region228: #{tpu_custom_call.1} parent=211 // pred_fallthru
          _
        %s678 = sand.u32 %s41, 1
        %s679 = sand.u32 %s41, 1
        %s680 = smul.addr %s679, 32
        %s681 = scalar_lea.vmem [#allocation2], %s680
        %p682 = pneg %p54
        %p683 = pneg %p51
        %s684 = sand.u32 %s67, 1
        %s685 = sand.u32 %s67, 1
        %s686 = smul.addr %s685, 24
        %s687 = scalar_lea.vmem [#allocation3], %s686
        %p688 = pneg %p80
        %p689 = pneg %p77
        %s690 = sand.u32 %s93, 1
        %s691 = sand.u32 %s93, 1
        %s692 = smul.addr %s691, 16
        %s693 = scalar_lea.vmem [#allocation4], %s692
        %p694 = pneg %p106
        %p695 = pneg %p103
        %s696 = sand.u32 %s119, 1
        %s697 = sand.u32 %s119, 1
        %s698 = smul.addr %s697, 24
        %s699 = scalar_lea.vmem [#allocation5], %s698
        %p700 = pneg %p132
        %p701 = pneg %p129
        %p702 = pneg %p153
        %p703 = pneg %p150
        %p704 = pneg %p174
        %p705 = pneg %p171
        %p706 = pneg %p195
        %p707 = pneg %p192
        %p708 = pneg %p216
        %p709 = pneg %p213
        %p710 = pneg %p237
        %p711 = pneg %p234
        %p712 = pneg %p258
        %p713 = pneg %p255
        %p714 = pneg %p279
        %p715 = pneg %p276
        %p716 = pneg %p300
        %p717 = pneg %p297
        %p718 = pneg %p321
        %p719 = pneg %p318
        %p720 = pneg %p342
        %p721 = pneg %p339
        %p722 = pneg %p368
        %p723 = pneg %p365
        %s724 = sand.u32 %s355, 1
        %s725 = scalar_lea.sflag [#allocation7], %s724
        %s726 = sand.u32 %s355, 1
        %s727 = smul.addr %s726, 32
        %s728 = scalar_lea.vmem [#allocation6], %s727
        %p729 = pneg %p394
        %p730 = pneg %p391
        %s731 = sand.u32 %s381, 1
        %s732 = scalar_lea.sflag [#allocation9], %s731
        %s733 = sand.u32 %s381, 1
        %s734 = smul.addr %s733, 24
        %s735 = scalar_lea.vmem [#allocation8], %s734
        %v736 = vld [vmem:[%s667] sm:$0xff]
        %v737 = vld [vmem:[%s667 + $0x8] sm:$0xff]
        %v738 = vld [vmem:[%s4] sm:$0xff]
        %v739 = vld [vmem:[%s4 + $0x8] sm:$0xff]
        %v740 = vadd.f32 %v736, %v737
        %v741 = vrot.slane %v740, 4
        %v742 = vadd.f32 %v740, %v741
        %v743 = vrot.slane %v742, 2
        %v744 = vadd.f32 %v742, %v743
        %v745 = vrot.slane %v744, 1
        %v746 = vadd.f32 %v744, %v745
        %v747 = vrcp.pop 16.0
        %v748 = vmul.f32 %v746, %v747
        %v749 = vsub.f32 %v736, %v748
        %v750 = vsub.f32 %v737, %v748
        %v751 = vmul.f32 %v749, %v749
        %v752 = vmul.f32 %v750, %v750
        %v753 = vadd.f32 %v751, %v752
        %v754 = vrot.slane %v753, 4
        %v755 = vadd.f32 %v753, %v754
        %v756 = vrot.slane %v755, 2
        %v757 = vadd.f32 %v755, %v756
        %v758 = vrot.slane %v757, 1
        %v759 = vadd.f32 %v757, %v758
        %v760 = vmul.f32 %v759, %v747
        %v761 = vadd.f32 %v760, 1e-05
        %v762 = vrsqrt.pop %v761
        %v763 = vmul.f32 %v749, %v762
        %v764 = vmul.f32 %v750, %v762
        %766 = vset.pattern.permute.xlu0 0
        %767 = vperm.xlu0 %766, %v738
        %v768 = vpop.permute.xlu0 %767
        %771 = vset.pattern.permute.xlu0 0
        %772 = vperm.xlu0 %771, %v739
        %v773 = vpop.permute.xlu0 %772
        %v775 = vmul.f32 %v763, %v768
        %v776 = vmul.f32 %v764, %v773
        %777 = vset.pattern.permute.xlu0 1
        %778 = vperm.xlu0 %777, %v738
        %v779 = vpop.permute.xlu0 %778
        %781 = vset.pattern.permute.xlu0 1
        %782 = vperm.xlu0 %781, %v739
        %v783 = vpop.permute.xlu0 %782
        %v785 = vadd.f32 %v775, %v779
        %v786 = vadd.f32 %v776, %v783
        %v787 = vld [vmem:[%s674] sm:$0xff]
        %s788 = scalar_lea.vmem %s674, 8 [#allocation5]
        %v789 = vld [vmem:[%s788] sm:$0xff]
        %s790 = scalar_lea.vmem %s674, 16 [#allocation5]
        %v791 = vld [vmem:[%s790] sm:$0xff]
        %v792 = vmul.f32 %v787, %v787
        %v793 = vmul.f32 %v789, %v789
        %v794 = vadd.f32 %v792, %v793
        %v795 = vmul.f32 %v791, %v791
        %v796 = vadd.f32 %v794, %v795
        %v797 = vrot.slane %v796, 4
        %v798 = vadd.f32 %v796, %v797
        %v799 = vrot.slane %v798, 2
        %v800 = vadd.f32 %v798, %v799
        %v801 = vrot.slane %v800, 1
        %v802 = vadd.f32 %v800, %v801
        %vm803 = vcmp.gt.f32.partialorder %v802, 0.0
        %v804 = vrsqrt.pop %v802
        %v805 = vmul.f32 %v804, 2.828427
        %v806 = vsel %vm803, %v805, 1.0
        %v807 = vmul.f32 %v787, %v806
        %v808 = vmul.f32 %v789, %v806
        %v809 = vmul.f32 %v791, %v806
        %v810 = vld [vmem:[%s6] sm:$0xff]
        %v811 = vld [vmem:[%s6 + $0x8] sm:$0xff]
        %vm812 = vcmask 64512
        %v814 = vsel %vm812, %v810, 0
        %v817 = vsel %vm812, %v811, 0
        %819 = vmatprep.subr.mxu0 0.0
        %820 = vmatpush1.msra.mxu0 0.0
        %821 = vmatprep.subr.mxu0 0.0
        %822 = vmatpush1.msra.mxu0 0.0
        %823 = vmatprep.subr.mxu0 0.0
        %824 = vmatpush1.msra.mxu0 0.0
        %825 = vmatprep.subr.mxu0 0.0
        %826 = vmatpush1.msra.mxu0 0.0
        %827 = vmatprep.subr.mxu0 0.0
        %828 = vmatpush1.msra.mxu0 0.0
        %829 = vmatprep.subr.mxu0 0.0
        %830 = vmatpush1.msra.mxu0 0.0
        %831 = vmatprep.subr.mxu0 0.0
        %832 = vmatpush1.msra.mxu0 0.0
        %833 = vmatprep.subr.mxu0 0.0
        %834 = vmatpush1.msra.mxu0 0.0
        %835 = vmatprep.subr.mxu0 0.0
        %836 = vmatpush1.msra.mxu0 0.0
        %837 = vmatprep.subr.mxu0 0.0
        %838 = vmatpush1.msra.mxu0 0.0
        %839 = vmatprep.subr.mxu0 0.0
        %840 = vmatpush1.msra.mxu0 0.0
        %841 = vmatprep.subr.mxu0 0.0
        %842 = vmatpush1.msra.mxu0 0.0
        %843 = vmatprep.subr.mxu0 0.0
        %844 = vmatpush1.msra.mxu0 0.0
        %845 = vmatprep.subr.mxu0 0.0
        %846 = vmatpush1.msra.mxu0 0.0
        %847 = vmatprep.subr.mxu0 0.0
        %848 = vmatpush1.msra.mxu0 0.0
        %849 = vmatprep.subr.mxu0 0.0
        %850 = vmatpush1.msra.mxu0 %v807
        %851 = vmatprep.subr.mxu0 0.0
        %852 = vmatpush2.msra.mxu0 0.0
        %853 = vmatprep.subr.mxu0 0.0
        %854 = vmatpush2.msra.mxu0 0.0
        %855 = vmatprep.subr.mxu0 0.0
        %856 = vmatpush2.msra.mxu0 0.0
        %857 = vmatprep.subr.mxu0 0.0
        %858 = vmatpush2.msra.mxu0 0.0
        %859 = vmatprep.subr.mxu0 0.0
        %860 = vmatpush2.msra.mxu0 0.0
        %861 = vmatprep.subr.mxu0 0.0
        %862 = vmatpush2.msra.mxu0 0.0
        %863 = vmatprep.subr.mxu0 0.0
        %864 = vmatpush2.msra.mxu0 0.0
        %865 = vmatprep.subr.mxu0 0.0
        %866 = vmatpush2.msra.mxu0 0.0
        %867 = vmatprep.subr.mxu0 0.0
        %868 = vmatpush2.msra.mxu0 0.0
        %869 = vmatprep.subr.mxu0 0.0
        %870 = vmatpush2.msra.mxu0 0.0
        %871 = vmatprep.subr.mxu0 0.0
        %872 = vmatpush2.msra.mxu0 0.0
        %873 = vmatprep.subr.mxu0 0.0
        %874 = vmatpush2.msra.mxu0 0.0
        %875 = vmatprep.subr.mxu0 0.0
        %876 = vmatpush2.msra.mxu0 0.0
        %877 = vmatprep.subr.mxu0 0.0
        %878 = vmatpush2.msra.mxu0 0.0
        %879 = vmatprep.subr.mxu0 0.0
        %880 = vmatpush2.msra.mxu0 0.0
        %881 = vmatprep.subr.mxu0 0.0
        %882 = vmatpush2.msra.mxu0 0.0
        %883 = vmatprep.mubr.f32.mxu0 0.0
        %884 = vmatmul.mubr.f32.gmra.mxu0 %v814
        %v885 = vpop.f32.mrf.mxu0
        %v886 = vadd.f32 0.0, %v885
        %v887 = vpop.f32.mrf.mxu0
        %888 = vmatprep.mubr.f32.mxu0 0.0
        %889 = vmatmul.mubr.f32.gmra.mxu0 %v817
        %v890 = vpop.f32.mrf.mxu0
        %v891 = vadd.f32 0.0, %v890
        %v892 = vpop.f32.mrf.mxu0
        %893 = vdwg.mxu0
        %894 = vmatprep.subr.mxu0 0.0
        %895 = vmatpush1.msra.mxu0 0.0
        %896 = vmatprep.subr.mxu0 0.0
        %897 = vmatpush1.msra.mxu0 0.0
        %898 = vmatprep.subr.mxu0 0.0
        %899 = vmatpush1.msra.mxu0 0.0
        %900 = vmatprep.subr.mxu0 0.0
        %901 = vmatpush1.msra.mxu0 0.0
        %902 = vmatprep.subr.mxu0 0.0
        %903 = vmatpush1.msra.mxu0 0.0
        %904 = vmatprep.subr.mxu0 0.0
        %905 = vmatpush1.msra.mxu0 0.0
        %906 = vmatprep.subr.mxu0 0.0
        %907 = vmatpush1.msra.mxu0 0.0
        %908 = vmatprep.subr.mxu0 0.0
        %909 = vmatpush1.msra.mxu0 0.0
        %910 = vmatprep.subr.mxu0 0.0
        %911 = vmatpush1.msra.mxu0 0.0
        %912 = vmatprep.subr.mxu0 0.0
        %913 = vmatpush1.msra.mxu0 0.0
        %914 = vmatprep.subr.mxu0 0.0
        %915 = vmatpush1.msra.mxu0 0.0
        %916 = vmatprep.subr.mxu0 0.0
        %917 = vmatpush1.msra.mxu0 0.0
        %918 = vmatprep.subr.mxu0 0.0
        %919 = vmatpush1.msra.mxu0 0.0
        %920 = vmatprep.subr.mxu0 0.0
        %921 = vmatpush1.msra.mxu0 0.0
        %922 = vmatprep.subr.mxu0 0.0
        %923 = vmatpush1.msra.mxu0 0.0
        %924 = vmatprep.subr.mxu0 0.0
        %925 = vmatpush1.msra.mxu0 %v808
        %926 = vmatprep.subr.mxu0 0.0
        %927 = vmatpush2.msra.mxu0 0.0
        %928 = vmatprep.subr.mxu0 0.0
        %929 = vmatpush2.msra.mxu0 0.0
        %930 = vmatprep.subr.mxu0 0.0
        %931 = vmatpush2.msra.mxu0 0.0
        %932 = vmatprep.subr.mxu0 0.0
        %933 = vmatpush2.msra.mxu0 0.0
        %934 = vmatprep.subr.mxu0 0.0
        %935 = vmatpush2.msra.mxu0 0.0
        %936 = vmatprep.subr.mxu0 0.0
        %937 = vmatpush2.msra.mxu0 0.0
        %938 = vmatprep.subr.mxu0 0.0
        %939 = vmatpush2.msra.mxu0 0.0
        %940 = vmatprep.subr.mxu0 0.0
        %941 = vmatpush2.msra.mxu0 0.0
        %942 = vmatprep.subr.mxu0 0.0
        %943 = vmatpush2.msra.mxu0 0.0
        %944 = vmatprep.subr.mxu0 0.0
        %945 = vmatpush2.msra.mxu0 0.0
        %946 = vmatprep.subr.mxu0 0.0
        %947 = vmatpush2.msra.mxu0 0.0
        %948 = vmatprep.subr.mxu0 0.0
        %949 = vmatpush2.msra.mxu0 0.0
        %950 = vmatprep.subr.mxu0 0.0
        %951 = vmatpush2.msra.mxu0 0.0
        %952 = vmatprep.subr.mxu0 0.0
        %953 = vmatpush2.msra.mxu0 0.0
        %954 = vmatprep.subr.mxu0 0.0
        %955 = vmatpush2.msra.mxu0 0.0
        %956 = vmatprep.subr.mxu0 0.0
        %957 = vmatpush2.msra.mxu0 0.0
        %958 = vmatprep.mubr.f32.mxu0 0.0
        %959 = vmatmul.mubr.f32.gmra.mxu0 %v814
        %v960 = vpop.f32.mrf.mxu0
        %v961 = vadd.f32 0.0, %v960
        %v962 = vpop.f32.mrf.mxu0
        %963 = vmatprep.mubr.f32.mxu0 0.0
        %964 = vmatmul.mubr.f32.gmra.mxu0 %v817
        %v965 = vpop.f32.mrf.mxu0
        %v966 = vadd.f32 0.0, %v965
        %v967 = vpop.f32.mrf.mxu0
        %968 = vdwg.mxu0
        %969 = vmatprep.subr.mxu0 0.0
        %970 = vmatpush1.msra.mxu0 0.0
        %971 = vmatprep.subr.mxu0 0.0
        %972 = vmatpush1.msra.mxu0 0.0
        %973 = vmatprep.subr.mxu0 0.0
        %974 = vmatpush1.msra.mxu0 0.0
        %975 = vmatprep.subr.mxu0 0.0
        %976 = vmatpush1.msra.mxu0 0.0
        %977 = vmatprep.subr.mxu0 0.0
        %978 = vmatpush1.msra.mxu0 0.0
        %979 = vmatprep.subr.mxu0 0.0
        %980 = vmatpush1.msra.mxu0 0.0
        %981 = vmatprep.subr.mxu0 0.0
        %982 = vmatpush1.msra.mxu0 0.0
        %983 = vmatprep.subr.mxu0 0.0
        %984 = vmatpush1.msra.mxu0 0.0
        %985 = vmatprep.subr.mxu0 0.0
        %986 = vmatpush1.msra.mxu0 0.0
        %987 = vmatprep.subr.mxu0 0.0
        %988 = vmatpush1.msra.mxu0 0.0
        %989 = vmatprep.subr.mxu0 0.0
        %990 = vmatpush1.msra.mxu0 0.0
        %991 = vmatprep.subr.mxu0 0.0
        %992 = vmatpush1.msra.mxu0 0.0
        %993 = vmatprep.subr.mxu0 0.0
        %994 = vmatpush1.msra.mxu0 0.0
        %995 = vmatprep.subr.mxu0 0.0
        %996 = vmatpush1.msra.mxu0 0.0
        %997 = vmatprep.subr.mxu0 0.0
        %998 = vmatpush1.msra.mxu0 0.0
        %999 = vmatprep.subr.mxu0 0.0
        %1000 = vmatpush1.msra.mxu0 %v809
        %1001 = vmatprep.subr.mxu0 0.0
        %1002 = vmatpush2.msra.mxu0 0.0
        %1003 = vmatprep.subr.mxu0 0.0
        %1004 = vmatpush2.msra.mxu0 0.0
        %1005 = vmatprep.subr.mxu0 0.0
        %1006 = vmatpush2.msra.mxu0 0.0
        %1007 = vmatprep.subr.mxu0 0.0
        %1008 = vmatpush2.msra.mxu0 0.0
        %1009 = vmatprep.subr.mxu0 0.0
        %1010 = vmatpush2.msra.mxu0 0.0
        %1011 = vmatprep.subr.mxu0 0.0
        %1012 = vmatpush2.msra.mxu0 0.0
        %1013 = vmatprep.subr.mxu0 0.0
        %1014 = vmatpush2.msra.mxu0 0.0
        %1015 = vmatprep.subr.mxu0 0.0
        %1016 = vmatpush2.msra.mxu0 0.0
        %1017 = vmatprep.subr.mxu0 0.0
        %1018 = vmatpush2.msra.mxu0 0.0
        %1019 = vmatprep.subr.mxu0 0.0
        %1020 = vmatpush2.msra.mxu0 0.0
        %1021 = vmatprep.subr.mxu0 0.0
        %1022 = vmatpush2.msra.mxu0 0.0
        %1023 = vmatprep.subr.mxu0 0.0
        %1024 = vmatpush2.msra.mxu0 0.0
        %1025 = vmatprep.subr.mxu0 0.0
        %1026 = vmatpush2.msra.mxu0 0.0
        %1027 = vmatprep.subr.mxu0 0.0
        %1028 = vmatpush2.msra.mxu0 0.0
        %1029 = vmatprep.subr.mxu0 0.0
        %1030 = vmatpush2.msra.mxu0 0.0
        %1031 = vmatprep.subr.mxu0 0.0
        %1032 = vmatpush2.msra.mxu0 0.0
        %1033 = vmatprep.mubr.f32.mxu0 0.0
        %1034 = vmatmul.mubr.f32.gmra.mxu0 %v814
        %v1035 = vpop.f32.mrf.mxu0
        %v1036 = vadd.f32 0.0, %v1035
        %v1037 = vpop.f32.mrf.mxu0
        %1038 = vmatprep.mubr.f32.mxu0 0.0
        %1039 = vmatmul.mubr.f32.gmra.mxu0 %v817
        %v1040 = vpop.f32.mrf.mxu0
        %v1041 = vadd.f32 0.0, %v1040
        %v1042 = vpop.f32.mrf.mxu0
        %1043 = vdwg.mxu0
        %v1044 = vmul.f32 %v886, %v886
        %v1045 = vmul.f32 %v891, %v891
        %v1046 = vmul.f32 %v961, %v961
        %v1047 = vmul.f32 %v966, %v966
        %v1048 = vadd.f32 %v1044, %v1046
        %v1049 = vadd.f32 %v1045, %v1047
        %v1050 = vmul.f32 %v1036, %v1036
        %v1051 = vmul.f32 %v1041, %v1041
        %v1052 = vadd.f32 %v1048, %v1050
        %v1053 = vadd.f32 %v1049, %v1051
        %v1054 = vrsqrt.pop %v1052
        %v1055 = vmul.f32 %v1052, %v1054
        %vm1056 = vcmp.eq.f32.partialorder %v1052, inf
        %v1057 = vsel %vm1056, %v1052, %v1055
        %vm1058 = vcmp.eq.f32.partialorder %v1052, 0.0
        %v1059 = vand.u32 %v1052, 2147483648
        %v1060 = vsel %vm1058, %v1059, %v1057
        %v1061 = vrsqrt.pop %v1053
        %v1062 = vmul.f32 %v1053, %v1061
        %vm1063 = vcmp.eq.f32.partialorder %v1053, inf
        %v1064 = vsel %vm1063, %v1053, %v1062
        %vm1065 = vcmp.eq.f32.partialorder %v1053, 0.0
        %v1066 = vand.u32 %v1053, 2147483648
        %v1067 = vsel %vm1065, %v1066, %v1064
        %v1068 = vld [vmem:[%s7] sm:$0xff]
        %v1069 = vld [vmem:[%s7 + $0x8] sm:$0xff]
        %v1070 = vld [vmem:[%s7 + $0x10] sm:$0xff]
        %v1071 = vld [vmem:[%s7 + $0x18] sm:$0xff]
        %v1072 = vld [vmem:[%s7 + $0x20] sm:$0xff]
        %v1073 = vld [vmem:[%s8] sm:$0xff]
        %v1074 = vld [vmem:[%s8 + $0x8] sm:$0xff]
        %v1075 = vld [vmem:[%s8 + $0x10] sm:$0xff]
        %v1076 = vld [vmem:[%s8 + $0x18] sm:$0xff]
        %v1077 = vld [vmem:[%s8 + $0x20] sm:$0xff]
        %vm1078 = vcmask 130048
        %v1080 = vsel %vm1078, %v1073, 0
        %v1083 = vsel %vm1078, %v1074, 0
        %v1086 = vsel %vm1078, %v1075, 0
        %v1089 = vsel %vm1078, %v1076, 0
        %v1092 = vsel %vm1078, %v1077, 0
        %1094 = vmatprep.subr.mxu0 0.0
        %1095 = vmatpush1.msra.mxu0 0.0
        %1096 = vmatprep.subr.mxu0 0.0
        %1097 = vmatpush1.msra.mxu0 0.0
        %1098 = vmatprep.subr.mxu0 0.0
        %1099 = vmatpush1.msra.mxu0 0.0
        %1100 = vmatprep.subr.mxu0 0.0
        %1101 = vmatpush1.msra.mxu0 0.0
        %1102 = vmatprep.subr.mxu0 0.0
        %1103 = vmatpush1.msra.mxu0 0.0
        %1104 = vmatprep.subr.mxu0 0.0
        %1105 = vmatpush1.msra.mxu0 0.0
        %1106 = vmatprep.subr.mxu0 0.0
        %1107 = vmatpush1.msra.mxu0 0.0
        %1108 = vmatprep.subr.mxu0 0.0
        %1109 = vmatpush1.msra.mxu0 0.0
        %1110 = vmatprep.subr.mxu0 0.0
        %1111 = vmatpush1.msra.mxu0 0.0
        %1112 = vmatprep.subr.mxu0 0.0
        %1113 = vmatpush1.msra.mxu0 0.0
        %1114 = vmatprep.subr.mxu0 0.0
        %1115 = vmatpush1.msra.mxu0 0.0
        %1116 = vmatprep.subr.mxu0 0.0
        %1117 = vmatpush1.msra.mxu0 0.0
        %1118 = vmatprep.subr.mxu0 0.0
        %1119 = vmatpush1.msra.mxu0 0.0
        %1120 = vmatprep.subr.mxu0 0.0
        %1121 = vmatpush1.msra.mxu0 0.0
        %1122 = vmatprep.subr.mxu0 0.0
        %1123 = vmatpush1.msra.mxu0 %v1067
        %1124 = vmatprep.subr.mxu0 0.0
        %1125 = vmatpush1.msra.mxu0 %v1060
        %1126 = vmatprep.subr.mxu0 0.0
        %1127 = vmatpush2.msra.mxu0 0.0
        %1128 = vmatprep.subr.mxu0 0.0
        %1129 = vmatpush2.msra.mxu0 0.0
        %1130 = vmatprep.subr.mxu0 0.0
        %1131 = vmatpush2.msra.mxu0 0.0
        %1132 = vmatprep.subr.mxu0 0.0
        %1133 = vmatpush2.msra.mxu0 0.0
        %1134 = vmatprep.subr.mxu0 0.0
        %1135 = vmatpush2.msra.mxu0 0.0
        %1136 = vmatprep.subr.mxu0 0.0
        %1137 = vmatpush2.msra.mxu0 0.0
        %1138 = vmatprep.subr.mxu0 0.0
        %1139 = vmatpush2.msra.mxu0 0.0
        %1140 = vmatprep.subr.mxu0 0.0
        %1141 = vmatpush2.msra.mxu0 0.0
        %1142 = vmatprep.subr.mxu0 0.0
        %1143 = vmatpush2.msra.mxu0 0.0
        %1144 = vmatprep.subr.mxu0 0.0
        %1145 = vmatpush2.msra.mxu0 0.0
        %1146 = vmatprep.subr.mxu0 0.0
        %1147 = vmatpush2.msra.mxu0 0.0
        %1148 = vmatprep.subr.mxu0 0.0
        %1149 = vmatpush2.msra.mxu0 0.0
        %1150 = vmatprep.subr.mxu0 0.0
        %1151 = vmatpush2.msra.mxu0 0.0
        %1152 = vmatprep.subr.mxu0 0.0
        %1153 = vmatpush2.msra.mxu0 0.0
        %1154 = vmatprep.subr.mxu0 0.0
        %1155 = vmatpush2.msra.mxu0 0.0
        %1156 = vmatprep.subr.mxu0 0.0
        %1157 = vmatpush2.msra.mxu0 0.0
        %1158 = vmatprep.mubr.f32.mxu0 0.0
        %1159 = vmatmul.mubr.f32.gmra.mxu0 %v1080
        %v1160 = vpop.f32.mrf.mxu0
        %v1161 = vadd.f32 0.0, %v1160
        %v1162 = vpop.f32.mrf.mxu0
        %1163 = vmatprep.mubr.f32.mxu0 0.0
        %1164 = vmatmul.mubr.f32.gmra.mxu0 %v1083
        %v1165 = vpop.f32.mrf.mxu0
        %v1166 = vadd.f32 0.0, %v1165
        %v1167 = vpop.f32.mrf.mxu0
        %1168 = vmatprep.mubr.f32.mxu0 0.0
        %1169 = vmatmul.mubr.f32.gmra.mxu0 %v1086
        %v1170 = vpop.f32.mrf.mxu0
        %v1171 = vadd.f32 0.0, %v1170
        %v1172 = vpop.f32.mrf.mxu0
        %1173 = vmatprep.mubr.f32.mxu0 0.0
        %1174 = vmatmul.mubr.f32.gmra.mxu0 %v1089
        %v1175 = vpop.f32.mrf.mxu0
        %v1176 = vadd.f32 0.0, %v1175
        %v1177 = vpop.f32.mrf.mxu0
        %1178 = vmatprep.mubr.f32.mxu0 0.0
        %1179 = vmatmul.mubr.f32.gmra.mxu0 %v1092
        %v1180 = vpop.f32.mrf.mxu0
        %v1181 = vadd.f32 0.0, %v1180
        %v1182 = vpop.f32.mrf.mxu0
        %1183 = vdwg.mxu0
        %v1185 = vsel %vm1078, %v1068, 0
        %v1188 = vsel %vm1078, %v1069, 0
        %v1191 = vsel %vm1078, %v1070, 0
        %v1194 = vsel %vm1078, %v1071, 0
        %v1197 = vsel %vm1078, %v1072, 0
        %1199 = vmatprep.subr.mxu0 0.0
        %1200 = vmatpush1.msra.mxu0 0.0
        %1201 = vmatprep.subr.mxu0 0.0
        %1202 = vmatpush1.msra.mxu0 0.0
        %1203 = vmatprep.subr.mxu0 0.0
        %1204 = vmatpush1.msra.mxu0 0.0
        %1205 = vmatprep.subr.mxu0 0.0
        %1206 = vmatpush1.msra.mxu0 0.0
        %1207 = vmatprep.subr.mxu0 0.0
        %1208 = vmatpush1.msra.mxu0 0.0
        %1209 = vmatprep.subr.mxu0 0.0
        %1210 = vmatpush1.msra.mxu0 0.0
        %1211 = vmatprep.subr.mxu0 0.0
        %1212 = vmatpush1.msra.mxu0 0.0
        %1213 = vmatprep.subr.mxu0 0.0
        %1214 = vmatpush1.msra.mxu0 0.0
        %1215 = vmatprep.subr.mxu0 0.0
        %1216 = vmatpush1.msra.mxu0 0.0
        %1217 = vmatprep.subr.mxu0 0.0
        %1218 = vmatpush1.msra.mxu0 0.0
        %1219 = vmatprep.subr.mxu0 0.0
        %1220 = vmatpush1.msra.mxu0 0.0
        %1221 = vmatprep.subr.mxu0 0.0
        %1222 = vmatpush1.msra.mxu0 0.0
        %1223 = vmatprep.subr.mxu0 0.0
        %1224 = vmatpush1.msra.mxu0 0.0
        %1225 = vmatprep.subr.mxu0 0.0
        %1226 = vmatpush1.msra.mxu0 0.0
        %1227 = vmatprep.subr.mxu0 0.0
        %1228 = vmatpush1.msra.mxu0 %v786
        %1229 = vmatprep.subr.mxu0 0.0
        %1230 = vmatpush1.msra.mxu0 %v785
        %1231 = vmatprep.subr.mxu0 0.0
        %1232 = vmatpush2.msra.mxu0 0.0
        %1233 = vmatprep.subr.mxu0 0.0
        %1234 = vmatpush2.msra.mxu0 0.0
        %1235 = vmatprep.subr.mxu0 0.0
        %1236 = vmatpush2.msra.mxu0 0.0
        %1237 = vmatprep.subr.mxu0 0.0
        %1238 = vmatpush2.msra.mxu0 0.0
        %1239 = vmatprep.subr.mxu0 0.0
        %1240 = vmatpush2.msra.mxu0 0.0
        %1241 = vmatprep.subr.mxu0 0.0
        %1242 = vmatpush2.msra.mxu0 0.0
        %1243 = vmatprep.subr.mxu0 0.0
        %1244 = vmatpush2.msra.mxu0 0.0
        %1245 = vmatprep.subr.mxu0 0.0
        %1246 = vmatpush2.msra.mxu0 0.0
        %1247 = vmatprep.subr.mxu0 0.0
        %1248 = vmatpush2.msra.mxu0 0.0
        %1249 = vmatprep.subr.mxu0 0.0
        %1250 = vmatpush2.msra.mxu0 0.0
        %1251 = vmatprep.subr.mxu0 0.0
        %1252 = vmatpush2.msra.mxu0 0.0
        %1253 = vmatprep.subr.mxu0 0.0
        %1254 = vmatpush2.msra.mxu0 0.0
        %1255 = vmatprep.subr.mxu0 0.0
        %1256 = vmatpush2.msra.mxu0 0.0
        %1257 = vmatprep.subr.mxu0 0.0
        %1258 = vmatpush2.msra.mxu0 0.0
        %1259 = vmatprep.subr.mxu0 0.0
        %1260 = vmatpush2.msra.mxu0 0.0
        %1261 = vmatprep.subr.mxu0 0.0
        %1262 = vmatpush2.msra.mxu0 0.0
        %1263 = vmatprep.mubr.f32.mxu0 0.0
        %1264 = vmatmul.mubr.f32.gmra.mxu0 %v1185
        %v1265 = vpop.f32.mrf.mxu0
        %v1266 = vadd.f32 %v1161, %v1265
        %v1267 = vpop.f32.mrf.mxu0
        %1268 = vmatprep.mubr.f32.mxu0 0.0
        %1269 = vmatmul.mubr.f32.gmra.mxu0 %v1188
        %v1270 = vpop.f32.mrf.mxu0
        %v1271 = vadd.f32 %v1166, %v1270
        %v1272 = vpop.f32.mrf.mxu0
        %1273 = vmatprep.mubr.f32.mxu0 0.0
        %1274 = vmatmul.mubr.f32.gmra.mxu0 %v1191
        %v1275 = vpop.f32.mrf.mxu0
        %v1276 = vadd.f32 %v1171, %v1275
        %v1277 = vpop.f32.mrf.mxu0
        %1278 = vmatprep.mubr.f32.mxu0 0.0
        %1279 = vmatmul.mubr.f32.gmra.mxu0 %v1194
        %v1280 = vpop.f32.mrf.mxu0
        %v1281 = vadd.f32 %v1176, %v1280
        %v1282 = vpop.f32.mrf.mxu0
        %1283 = vmatprep.mubr.f32.mxu0 0.0
        %1284 = vmatmul.mubr.f32.gmra.mxu0 %v1197
        %v1285 = vpop.f32.mrf.mxu0
        %v1286 = vadd.f32 %v1181, %v1285
        %v1287 = vpop.f32.mrf.mxu0
        %1288 = vdwg.mxu0
        %v1289 = vld [vmem:[%s9] sm:$0xff]
        %v1290 = vld [vmem:[%s9 + $0x8] sm:$0xff]
        %v1291 = vld [vmem:[%s9 + $0x10] sm:$0xff]
        %v1292 = vld [vmem:[%s9 + $0x18] sm:$0xff]
        %v1293 = vld [vmem:[%s9 + $0x20] sm:$0xff]
        %1295 = vset.pattern.permute.xlu0 0
        %1296 = vperm.xlu0 %1295, %v1289
        %v1297 = vpop.permute.xlu0 %1296
        %1300 = vset.pattern.permute.xlu0 0
        %1301 = vperm.xlu0 %1300, %v1290
        %v1302 = vpop.permute.xlu0 %1301
        %1305 = vset.pattern.permute.xlu0 0
        %1306 = vperm.xlu0 %1305, %v1291
        %v1307 = vpop.permute.xlu0 %1306
        %1310 = vset.pattern.permute.xlu0 0
        %1311 = vperm.xlu0 %1310, %v1292
        %v1312 = vpop.permute.xlu0 %1311
        %1315 = vset.pattern.permute.xlu0 0
        %1316 = vperm.xlu0 %1315, %v1293
        %v1317 = vpop.permute.xlu0 %1316
        %v1319 = vadd.f32 %v1266, %v1297
        %v1320 = vadd.f32 %v1271, %v1302
        %v1321 = vadd.f32 %v1276, %v1307
        %v1322 = vadd.f32 %v1281, %v1312
        %v1323 = vadd.f32 %v1286, %v1317
        %v1324 = vmax.f32 %v1319, 0.0
        %v1325 = vmax.f32 %v1320, 0.0
        %v1326 = vmax.f32 %v1321, 0.0
        %v1327 = vmax.f32 %v1322, 0.0
        %v1328 = vmul.f32 %v1323, 0.5
        %v1329 = vtanh.pop %v1328
        %v1330 = vadd.f32 %v1329, 1.0
        %v1331 = vmul.f32 %v1330, 0.5
        %v1332 = vmul.f32 %v1331, %v891
        %v1333 = vmul.f32 %v1331, %v966
        %v1334 = vmul.f32 %v1331, %v1041
        %v1335 = vld [vmem:[%s10] sm:$0xff]
        %v1336 = vld [vmem:[%s10 + $0x8] sm:$0xff]
        %v1338 = vsel %vm812, %v1335, 0
        %v1341 = vsel %vm812, %v1336, 0
        %1343 = vmatprep.subr.mxu0 0.0
        %1344 = vmatpush1.msra.mxu0 0.0
        %1345 = vmatprep.subr.mxu0 0.0
        %1346 = vmatpush1.msra.mxu0 0.0
        %1347 = vmatprep.subr.mxu0 0.0
        %1348 = vmatpush1.msra.mxu0 0.0
        %1349 = vmatprep.subr.mxu0 0.0
        %1350 = vmatpush1.msra.mxu0 0.0
        %1351 = vmatprep.subr.mxu0 0.0
        %1352 = vmatpush1.msra.mxu0 0.0
        %1353 = vmatprep.subr.mxu0 0.0
        %1354 = vmatpush1.msra.mxu0 0.0
        %1355 = vmatprep.subr.mxu0 0.0
        %1356 = vmatpush1.msra.mxu0 0.0
        %1357 = vmatprep.subr.mxu0 0.0
        %1358 = vmatpush1.msra.mxu0 0.0
        %1359 = vmatprep.subr.mxu0 0.0
        %1360 = vmatpush1.msra.mxu0 0.0
        %1361 = vmatprep.subr.mxu0 0.0
        %1362 = vmatpush1.msra.mxu0 0.0
        %1363 = vmatprep.subr.mxu0 0.0
        %1364 = vmatpush1.msra.mxu0 0.0
        %1365 = vmatprep.subr.mxu0 0.0
        %1366 = vmatpush1.msra.mxu0 0.0
        %1367 = vmatprep.subr.mxu0 0.0
        %1368 = vmatpush1.msra.mxu0 0.0
        %1369 = vmatprep.subr.mxu0 0.0
        %1370 = vmatpush1.msra.mxu0 0.0
        %1371 = vmatprep.subr.mxu0 0.0
        %1372 = vmatpush1.msra.mxu0 0.0
        %1373 = vmatprep.subr.mxu0 0.0
        %1374 = vmatpush1.msra.mxu0 %v1332
        %1375 = vmatprep.subr.mxu0 0.0
        %1376 = vmatpush2.msra.mxu0 0.0
        %1377 = vmatprep.subr.mxu0 0.0
        %1378 = vmatpush2.msra.mxu0 0.0
        %1379 = vmatprep.subr.mxu0 0.0
        %1380 = vmatpush2.msra.mxu0 0.0
        %1381 = vmatprep.subr.mxu0 0.0
        %1382 = vmatpush2.msra.mxu0 0.0
        %1383 = vmatprep.subr.mxu0 0.0
        %1384 = vmatpush2.msra.mxu0 0.0
        %1385 = vmatprep.subr.mxu0 0.0
        %1386 = vmatpush2.msra.mxu0 0.0
        %1387 = vmatprep.subr.mxu0 0.0
        %1388 = vmatpush2.msra.mxu0 0.0
        %1389 = vmatprep.subr.mxu0 0.0
        %1390 = vmatpush2.msra.mxu0 0.0
        %1391 = vmatprep.subr.mxu0 0.0
        %1392 = vmatpush2.msra.mxu0 0.0
        %1393 = vmatprep.subr.mxu0 0.0
        %1394 = vmatpush2.msra.mxu0 0.0
        %1395 = vmatprep.subr.mxu0 0.0
        %1396 = vmatpush2.msra.mxu0 0.0
        %1397 = vmatprep.subr.mxu0 0.0
        %1398 = vmatpush2.msra.mxu0 0.0
        %1399 = vmatprep.subr.mxu0 0.0
        %1400 = vmatpush2.msra.mxu0 0.0
        %1401 = vmatprep.subr.mxu0 0.0
        %1402 = vmatpush2.msra.mxu0 0.0
        %1403 = vmatprep.subr.mxu0 0.0
        %1404 = vmatpush2.msra.mxu0 0.0
        %1405 = vmatprep.subr.mxu0 0.0
        %1406 = vmatpush2.msra.mxu0 0.0
        %1407 = vmatprep.mubr.f32.mxu0 0.0
        %1408 = vmatmul.mubr.f32.gmra.mxu0 %v1338
        %v1409 = vpop.f32.mrf.mxu0
        %v1410 = vadd.f32 0.0, %v1409
        %v1411 = vpop.f32.mrf.mxu0
        %1412 = vmatprep.mubr.f32.mxu0 0.0
        %1413 = vmatmul.mubr.f32.gmra.mxu0 %v1341
        %v1414 = vpop.f32.mrf.mxu0
        %v1415 = vadd.f32 0.0, %v1414
        %v1416 = vpop.f32.mrf.mxu0
        %1417 = vdwg.mxu0
        %1418 = vmatprep.subr.mxu0 0.0
        %1419 = vmatpush1.msra.mxu0 0.0
        %1420 = vmatprep.subr.mxu0 0.0
        %1421 = vmatpush1.msra.mxu0 0.0
        %1422 = vmatprep.subr.mxu0 0.0
        %1423 = vmatpush1.msra.mxu0 0.0
        %1424 = vmatprep.subr.mxu0 0.0
        %1425 = vmatpush1.msra.mxu0 0.0
        %1426 = vmatprep.subr.mxu0 0.0
        %1427 = vmatpush1.msra.mxu0 0.0
        %1428 = vmatprep.subr.mxu0 0.0
        %1429 = vmatpush1.msra.mxu0 0.0
        %1430 = vmatprep.subr.mxu0 0.0
        %1431 = vmatpush1.msra.mxu0 0.0
        %1432 = vmatprep.subr.mxu0 0.0
        %1433 = vmatpush1.msra.mxu0 0.0
        %1434 = vmatprep.subr.mxu0 0.0
        %1435 = vmatpush1.msra.mxu0 0.0
        %1436 = vmatprep.subr.mxu0 0.0
        %1437 = vmatpush1.msra.mxu0 0.0
        %1438 = vmatprep.subr.mxu0 0.0
        %1439 = vmatpush1.msra.mxu0 0.0
        %1440 = vmatprep.subr.mxu0 0.0
        %1441 = vmatpush1.msra.mxu0 0.0
        %1442 = vmatprep.subr.mxu0 0.0
        %1443 = vmatpush1.msra.mxu0 0.0
        %1444 = vmatprep.subr.mxu0 0.0
        %1445 = vmatpush1.msra.mxu0 0.0
        %1446 = vmatprep.subr.mxu0 0.0
        %1447 = vmatpush1.msra.mxu0 0.0
        %1448 = vmatprep.subr.mxu0 0.0
        %1449 = vmatpush1.msra.mxu0 %v1333
        %1450 = vmatprep.subr.mxu0 0.0
        %1451 = vmatpush2.msra.mxu0 0.0
        %1452 = vmatprep.subr.mxu0 0.0
        %1453 = vmatpush2.msra.mxu0 0.0
        %1454 = vmatprep.subr.mxu0 0.0
        %1455 = vmatpush2.msra.mxu0 0.0
        %1456 = vmatprep.subr.mxu0 0.0
        %1457 = vmatpush2.msra.mxu0 0.0
        %1458 = vmatprep.subr.mxu0 0.0
        %1459 = vmatpush2.msra.mxu0 0.0
        %1460 = vmatprep.subr.mxu0 0.0
        %1461 = vmatpush2.msra.mxu0 0.0
        %1462 = vmatprep.subr.mxu0 0.0
        %1463 = vmatpush2.msra.mxu0 0.0
        %1464 = vmatprep.subr.mxu0 0.0
        %1465 = vmatpush2.msra.mxu0 0.0
        %1466 = vmatprep.subr.mxu0 0.0
        %1467 = vmatpush2.msra.mxu0 0.0
        %1468 = vmatprep.subr.mxu0 0.0
        %1469 = vmatpush2.msra.mxu0 0.0
        %1470 = vmatprep.subr.mxu0 0.0
        %1471 = vmatpush2.msra.mxu0 0.0
        %1472 = vmatprep.subr.mxu0 0.0
        %1473 = vmatpush2.msra.mxu0 0.0
        %1474 = vmatprep.subr.mxu0 0.0
        %1475 = vmatpush2.msra.mxu0 0.0
        %1476 = vmatprep.subr.mxu0 0.0
        %1477 = vmatpush2.msra.mxu0 0.0
        %1478 = vmatprep.subr.mxu0 0.0
        %1479 = vmatpush2.msra.mxu0 0.0
        %1480 = vmatprep.subr.mxu0 0.0
        %1481 = vmatpush2.msra.mxu0 0.0
        %1482 = vmatprep.mubr.f32.mxu0 0.0
        %1483 = vmatmul.mubr.f32.gmra.mxu0 %v1338
        %v1484 = vpop.f32.mrf.mxu0
        %v1485 = vadd.f32 0.0, %v1484
        %v1486 = vpop.f32.mrf.mxu0
        %1487 = vmatprep.mubr.f32.mxu0 0.0
        %1488 = vmatmul.mubr.f32.gmra.mxu0 %v1341
        %v1489 = vpop.f32.mrf.mxu0
        %v1490 = vadd.f32 0.0, %v1489
        %v1491 = vpop.f32.mrf.mxu0
        %1492 = vdwg.mxu0
        %1493 = vmatprep.subr.mxu0 0.0
        %1494 = vmatpush1.msra.mxu0 0.0
        %1495 = vmatprep.subr.mxu0 0.0
        %1496 = vmatpush1.msra.mxu0 0.0
        %1497 = vmatprep.subr.mxu0 0.0
        %1498 = vmatpush1.msra.mxu0 0.0
        %1499 = vmatprep.subr.mxu0 0.0
        %1500 = vmatpush1.msra.mxu0 0.0
        %1501 = vmatprep.subr.mxu0 0.0
        %1502 = vmatpush1.msra.mxu0 0.0
        %1503 = vmatprep.subr.mxu0 0.0
        %1504 = vmatpush1.msra.mxu0 0.0
        %1505 = vmatprep.subr.mxu0 0.0
        %1506 = vmatpush1.msra.mxu0 0.0
        %1507 = vmatprep.subr.mxu0 0.0
        %1508 = vmatpush1.msra.mxu0 0.0
        %1509 = vmatprep.subr.mxu0 0.0
        %1510 = vmatpush1.msra.mxu0 0.0
        %1511 = vmatprep.subr.mxu0 0.0
        %1512 = vmatpush1.msra.mxu0 0.0
        %1513 = vmatprep.subr.mxu0 0.0
        %1514 = vmatpush1.msra.mxu0 0.0
        %1515 = vmatprep.subr.mxu0 0.0
        %1516 = vmatpush1.msra.mxu0 0.0
        %1517 = vmatprep.subr.mxu0 0.0
        %1518 = vmatpush1.msra.mxu0 0.0
        %1519 = vmatprep.subr.mxu0 0.0
        %1520 = vmatpush1.msra.mxu0 0.0
        %1521 = vmatprep.subr.mxu0 0.0
        %1522 = vmatpush1.msra.mxu0 0.0
        %1523 = vmatprep.subr.mxu0 0.0
        %1524 = vmatpush1.msra.mxu0 %v1334
        %1525 = vmatprep.subr.mxu0 0.0
        %1526 = vmatpush2.msra.mxu0 0.0
        %1527 = vmatprep.subr.mxu0 0.0
        %1528 = vmatpush2.msra.mxu0 0.0
        %1529 = vmatprep.subr.mxu0 0.0
        %1530 = vmatpush2.msra.mxu0 0.0
        %1531 = vmatprep.subr.mxu0 0.0
        %1532 = vmatpush2.msra.mxu0 0.0
        %1533 = vmatprep.subr.mxu0 0.0
        %1534 = vmatpush2.msra.mxu0 0.0
        %1535 = vmatprep.subr.mxu0 0.0
        %1536 = vmatpush2.msra.mxu0 0.0
        %1537 = vmatprep.subr.mxu0 0.0
        %1538 = vmatpush2.msra.mxu0 0.0
        %1539 = vmatprep.subr.mxu0 0.0
        %1540 = vmatpush2.msra.mxu0 0.0
        %1541 = vmatprep.subr.mxu0 0.0
        %1542 = vmatpush2.msra.mxu0 0.0
        %1543 = vmatprep.subr.mxu0 0.0
        %1544 = vmatpush2.msra.mxu0 0.0
        %1545 = vmatprep.subr.mxu0 0.0
        %1546 = vmatpush2.msra.mxu0 0.0
        %1547 = vmatprep.subr.mxu0 0.0
        %1548 = vmatpush2.msra.mxu0 0.0
        %1549 = vmatprep.subr.mxu0 0.0
        %1550 = vmatpush2.msra.mxu0 0.0
        %1551 = vmatprep.subr.mxu0 0.0
        %1552 = vmatpush2.msra.mxu0 0.0
        %1553 = vmatprep.subr.mxu0 0.0
        %1554 = vmatpush2.msra.mxu0 0.0
        %1555 = vmatprep.subr.mxu0 0.0
        %1556 = vmatpush2.msra.mxu0 0.0
        %1557 = vmatprep.mubr.f32.mxu0 0.0
        %1558 = vmatmul.mubr.f32.gmra.mxu0 %v1338
        %v1559 = vpop.f32.mrf.mxu0
        %v1560 = vadd.f32 0.0, %v1559
        %v1561 = vpop.f32.mrf.mxu0
        %1562 = vmatprep.mubr.f32.mxu0 0.0
        %1563 = vmatmul.mubr.f32.gmra.mxu0 %v1341
        %v1564 = vpop.f32.mrf.mxu0
        %v1565 = vadd.f32 0.0, %v1564
        %v1566 = vpop.f32.mrf.mxu0
        %1567 = vdwg.mxu0
        %v1568 = vmul.f32 %v1410, %v1410
        %v1569 = vmul.f32 %v1415, %v1415
        %v1570 = vmul.f32 %v1485, %v1485
        %v1571 = vmul.f32 %v1490, %v1490
        %v1572 = vadd.f32 %v1568, %v1570
        %v1573 = vadd.f32 %v1569, %v1571
        %v1574 = vmul.f32 %v1560, %v1560
        %v1575 = vmul.f32 %v1565, %v1565
        %v1576 = vadd.f32 %v1572, %v1574
        %v1577 = vadd.f32 %v1573, %v1575
        %v1578 = vrsqrt.pop %v1576
        %v1579 = vmul.f32 %v1576, %v1578
        %vm1580 = vcmp.eq.f32.partialorder %v1576, inf
        %v1581 = vsel %vm1580, %v1576, %v1579
        %vm1582 = vcmp.eq.f32.partialorder %v1576, 0.0
        %v1583 = vand.u32 %v1576, 2147483648
        %v1584 = vsel %vm1582, %v1583, %v1581
        %v1585 = vrsqrt.pop %v1577
        %v1586 = vmul.f32 %v1577, %v1585
        %vm1587 = vcmp.eq.f32.partialorder %v1577, inf
        %v1588 = vsel %vm1587, %v1577, %v1586
        %vm1589 = vcmp.eq.f32.partialorder %v1577, 0.0
        %v1590 = vand.u32 %v1577, 2147483648
        %v1591 = vsel %vm1589, %v1590, %v1588
        %v1592 = vld [vmem:[%s11] sm:$0xff]
        %v1593 = vld [vmem:[%s11 + $0x8] sm:$0xff]
        %v1594 = vld [vmem:[%s11 + $0x10] sm:$0xff]
        %v1595 = vld [vmem:[%s11 + $0x18] sm:$0xff]
        %v1596 = vld [vmem:[%s11 + $0x20] sm:$0xff]
        %v1597 = vld [vmem:[%s12] sm:$0xff]
        %v1598 = vld [vmem:[%s12 + $0x8] sm:$0xff]
        %v1599 = vld [vmem:[%s12 + $0x10] sm:$0xff]
        %v1600 = vld [vmem:[%s12 + $0x18] sm:$0xff]
        %v1601 = vld [vmem:[%s12 + $0x20] sm:$0xff]
        %v1603 = vsel %vm1078, %v1597, 0
        %v1606 = vsel %vm1078, %v1598, 0
        %v1609 = vsel %vm1078, %v1599, 0
        %v1612 = vsel %vm1078, %v1600, 0
        %v1615 = vsel %vm1078, %v1601, 0
        %1617 = vmatprep.subr.mxu0 0.0
        %1618 = vmatpush1.msra.mxu0 0.0
        %1619 = vmatprep.subr.mxu0 0.0
        %1620 = vmatpush1.msra.mxu0 0.0
        %1621 = vmatprep.subr.mxu0 0.0
        %1622 = vmatpush1.msra.mxu0 0.0
        %1623 = vmatprep.subr.mxu0 0.0
        %1624 = vmatpush1.msra.mxu0 0.0
        %1625 = vmatprep.subr.mxu0 0.0
        %1626 = vmatpush1.msra.mxu0 0.0
        %1627 = vmatprep.subr.mxu0 0.0
        %1628 = vmatpush1.msra.mxu0 0.0
        %1629 = vmatprep.subr.mxu0 0.0
        %1630 = vmatpush1.msra.mxu0 0.0
        %1631 = vmatprep.subr.mxu0 0.0
        %1632 = vmatpush1.msra.mxu0 0.0
        %1633 = vmatprep.subr.mxu0 0.0
        %1634 = vmatpush1.msra.mxu0 0.0
        %1635 = vmatprep.subr.mxu0 0.0
        %1636 = vmatpush1.msra.mxu0 0.0
        %1637 = vmatprep.subr.mxu0 0.0
        %1638 = vmatpush1.msra.mxu0 0.0
        %1639 = vmatprep.subr.mxu0 0.0
        %1640 = vmatpush1.msra.mxu0 0.0
        %1641 = vmatprep.subr.mxu0 0.0
        %1642 = vmatpush1.msra.mxu0 0.0
        %1643 = vmatprep.subr.mxu0 0.0
        %1644 = vmatpush1.msra.mxu0 0.0
        %1645 = vmatprep.subr.mxu0 0.0
        %1646 = vmatpush1.msra.mxu0 %v1591
        %1647 = vmatprep.subr.mxu0 0.0
        %1648 = vmatpush1.msra.mxu0 %v1584
        %1649 = vmatprep.subr.mxu0 0.0
        %1650 = vmatpush2.msra.mxu0 0.0
        %1651 = vmatprep.subr.mxu0 0.0
        %1652 = vmatpush2.msra.mxu0 0.0
        %1653 = vmatprep.subr.mxu0 0.0
        %1654 = vmatpush2.msra.mxu0 0.0
        %1655 = vmatprep.subr.mxu0 0.0
        %1656 = vmatpush2.msra.mxu0 0.0
        %1657 = vmatprep.subr.mxu0 0.0
        %1658 = vmatpush2.msra.mxu0 0.0
        %1659 = vmatprep.subr.mxu0 0.0
        %1660 = vmatpush2.msra.mxu0 0.0
        %1661 = vmatprep.subr.mxu0 0.0
        %1662 = vmatpush2.msra.mxu0 0.0
        %1663 = vmatprep.subr.mxu0 0.0
        %1664 = vmatpush2.msra.mxu0 0.0
        %1665 = vmatprep.subr.mxu0 0.0
        %1666 = vmatpush2.msra.mxu0 0.0
        %1667 = vmatprep.subr.mxu0 0.0
        %1668 = vmatpush2.msra.mxu0 0.0
        %1669 = vmatprep.subr.mxu0 0.0
        %1670 = vmatpush2.msra.mxu0 0.0
        %1671 = vmatprep.subr.mxu0 0.0
        %1672 = vmatpush2.msra.mxu0 0.0
        %1673 = vmatprep.subr.mxu0 0.0
        %1674 = vmatpush2.msra.mxu0 0.0
        %1675 = vmatprep.subr.mxu0 0.0
        %1676 = vmatpush2.msra.mxu0 0.0
        %1677 = vmatprep.subr.mxu0 0.0
        %1678 = vmatpush2.msra.mxu0 0.0
        %1679 = vmatprep.subr.mxu0 0.0
        %1680 = vmatpush2.msra.mxu0 0.0
        %1681 = vmatprep.mubr.f32.mxu0 0.0
        %1682 = vmatmul.mubr.f32.gmra.mxu0 %v1603
        %v1683 = vpop.f32.mrf.mxu0
        %v1684 = vadd.f32 0.0, %v1683
        %v1685 = vpop.f32.mrf.mxu0
        %1686 = vmatprep.mubr.f32.mxu0 0.0
        %1687 = vmatmul.mubr.f32.gmra.mxu0 %v1606
        %v1688 = vpop.f32.mrf.mxu0
        %v1689 = vadd.f32 0.0, %v1688
        %v1690 = vpop.f32.mrf.mxu0
        %1691 = vmatprep.mubr.f32.mxu0 0.0
        %1692 = vmatmul.mubr.f32.gmra.mxu0 %v1609
        %v1693 = vpop.f32.mrf.mxu0
        %v1694 = vadd.f32 0.0, %v1693
        %v1695 = vpop.f32.mrf.mxu0
        %1696 = vmatprep.mubr.f32.mxu0 0.0
        %1697 = vmatmul.mubr.f32.gmra.mxu0 %v1612
        %v1698 = vpop.f32.mrf.mxu0
        %v1699 = vadd.f32 0.0, %v1698
        %v1700 = vpop.f32.mrf.mxu0
        %1701 = vmatprep.mubr.f32.mxu0 0.0
        %1702 = vmatmul.mubr.f32.gmra.mxu0 %v1615
        %v1703 = vpop.f32.mrf.mxu0
        %v1704 = vadd.f32 0.0, %v1703
        %v1705 = vpop.f32.mrf.mxu0
        %1706 = vdwg.mxu0
        %vm1707 = vcmask 261120
        %v1709 = vsel %vm1707, %v1592, 0
        %v1712 = vsel %vm1707, %v1593, 0
        %v1715 = vsel %vm1707, %v1594, 0
        %v1718 = vsel %vm1707, %v1595, 0
        %v1721 = vsel %vm1707, %v1596, 0
        %1723 = vmatprep.subr.mxu0 0.0
        %1724 = vmatpush1.msra.mxu0 0.0
        %1725 = vmatprep.subr.mxu0 0.0
        %1726 = vmatpush1.msra.mxu0 0.0
        %1727 = vmatprep.subr.mxu0 0.0
        %1728 = vmatpush1.msra.mxu0 0.0
        %1729 = vmatprep.subr.mxu0 0.0
        %1730 = vmatpush1.msra.mxu0 0.0
        %1731 = vmatprep.subr.mxu0 0.0
        %1732 = vmatpush1.msra.mxu0 0.0
        %1733 = vmatprep.subr.mxu0 0.0
        %1734 = vmatpush1.msra.mxu0 0.0
        %1735 = vmatprep.subr.mxu0 0.0
        %1736 = vmatpush1.msra.mxu0 0.0
        %1737 = vmatprep.subr.mxu0 0.0
        %1738 = vmatpush1.msra.mxu0 0.0
        %1739 = vmatprep.subr.mxu0 0.0
        %1740 = vmatpush1.msra.mxu0 0.0
        %1741 = vmatprep.subr.mxu0 0.0
        %1742 = vmatpush1.msra.mxu0 0.0
        %1743 = vmatprep.subr.mxu0 0.0
        %1744 = vmatpush1.msra.mxu0 0.0
        %1745 = vmatprep.subr.mxu0 0.0
        %1746 = vmatpush1.msra.mxu0 0.0
        %1747 = vmatprep.subr.mxu0 0.0
        %1748 = vmatpush1.msra.mxu0 %v1327
        %1749 = vmatprep.subr.mxu0 0.0
        %1750 = vmatpush1.msra.mxu0 %v1326
        %1751 = vmatprep.subr.mxu0 0.0
        %1752 = vmatpush1.msra.mxu0 %v1325
        %1753 = vmatprep.subr.mxu0 0.0
        %1754 = vmatpush1.msra.mxu0 %v1324
        %1755 = vmatprep.subr.mxu0 0.0
        %1756 = vmatpush2.msra.mxu0 0.0
        %1757 = vmatprep.subr.mxu0 0.0
        %1758 = vmatpush2.msra.mxu0 0.0
        %1759 = vmatprep.subr.mxu0 0.0
        %1760 = vmatpush2.msra.mxu0 0.0
        %1761 = vmatprep.subr.mxu0 0.0
        %1762 = vmatpush2.msra.mxu0 0.0
        %1763 = vmatprep.subr.mxu0 0.0
        %1764 = vmatpush2.msra.mxu0 0.0
        %1765 = vmatprep.subr.mxu0 0.0
        %1766 = vmatpush2.msra.mxu0 0.0
        %1767 = vmatprep.subr.mxu0 0.0
        %1768 = vmatpush2.msra.mxu0 0.0
        %1769 = vmatprep.subr.mxu0 0.0
        %1770 = vmatpush2.msra.mxu0 0.0
        %1771 = vmatprep.subr.mxu0 0.0
        %1772 = vmatpush2.msra.mxu0 0.0
        %1773 = vmatprep.subr.mxu0 0.0
        %1774 = vmatpush2.msra.mxu0 0.0
        %1775 = vmatprep.subr.mxu0 0.0
        %1776 = vmatpush2.msra.mxu0 0.0
        %1777 = vmatprep.subr.mxu0 0.0
        %1778 = vmatpush2.msra.mxu0 0.0
        %1779 = vmatprep.subr.mxu0 0.0
        %1780 = vmatpush2.msra.mxu0 0.0
        %1781 = vmatprep.subr.mxu0 0.0
        %1782 = vmatpush2.msra.mxu0 0.0
        %1783 = vmatprep.subr.mxu0 0.0
        %1784 = vmatpush2.msra.mxu0 0.0
        %1785 = vmatprep.subr.mxu0 0.0
        %1786 = vmatpush2.msra.mxu0 0.0
        %1787 = vmatprep.mubr.f32.mxu0 0.0
        %1788 = vmatmul.mubr.f32.gmra.mxu0 %v1709
        %v1789 = vpop.f32.mrf.mxu0
        %v1790 = vadd.f32 %v1684, %v1789
        %v1791 = vpop.f32.mrf.mxu0
        %1792 = vmatprep.mubr.f32.mxu0 0.0
        %1793 = vmatmul.mubr.f32.gmra.mxu0 %v1712
        %v1794 = vpop.f32.mrf.mxu0
        %v1795 = vadd.f32 %v1689, %v1794
        %v1796 = vpop.f32.mrf.mxu0
        %1797 = vmatprep.mubr.f32.mxu0 0.0
        %1798 = vmatmul.mubr.f32.gmra.mxu0 %v1715
        %v1799 = vpop.f32.mrf.mxu0
        %v1800 = vadd.f32 %v1694, %v1799
        %v1801 = vpop.f32.mrf.mxu0
        %1802 = vmatprep.mubr.f32.mxu0 0.0
        %1803 = vmatmul.mubr.f32.gmra.mxu0 %v1718
        %v1804 = vpop.f32.mrf.mxu0
        %v1805 = vadd.f32 %v1699, %v1804
        %v1806 = vpop.f32.mrf.mxu0
        %1807 = vmatprep.mubr.f32.mxu0 0.0
        %1808 = vmatmul.mubr.f32.gmra.mxu0 %v1721
        %v1809 = vpop.f32.mrf.mxu0
        %v1810 = vadd.f32 %v1704, %v1809
        %v1811 = vpop.f32.mrf.mxu0
        %1812 = vdwg.mxu0
        %v1813 = vld [vmem:[%s13] sm:$0xff]
        %v1814 = vld [vmem:[%s13 + $0x8] sm:$0xff]
        %v1815 = vld [vmem:[%s13 + $0x10] sm:$0xff]
        %v1816 = vld [vmem:[%s13 + $0x18] sm:$0xff]
        %v1817 = vld [vmem:[%s13 + $0x20] sm:$0xff]
        %1819 = vset.pattern.permute.xlu0 0
        %1820 = vperm.xlu0 %1819, %v1813
        %v1821 = vpop.permute.xlu0 %1820
        %1824 = vset.pattern.permute.xlu0 0
        %1825 = vperm.xlu0 %1824, %v1814
        %v1826 = vpop.permute.xlu0 %1825
        %1829 = vset.pattern.permute.xlu0 0
        %1830 = vperm.xlu0 %1829, %v1815
        %v1831 = vpop.permute.xlu0 %1830
        %1834 = vset.pattern.permute.xlu0 0
        %1835 = vperm.xlu0 %1834, %v1816
        %v1836 = vpop.permute.xlu0 %1835
        %1839 = vset.pattern.permute.xlu0 0
        %1840 = vperm.xlu0 %1839, %v1817
        %v1841 = vpop.permute.xlu0 %1840
        %v1843 = vadd.f32 %v1790, %v1821
        %v1844 = vadd.f32 %v1795, %v1826
        %v1845 = vadd.f32 %v1800, %v1831
        %v1846 = vadd.f32 %v1805, %v1836
        %v1847 = vadd.f32 %v1810, %v1841
        %v1848 = vmax.f32 %v1843, 0.0
        %v1849 = vmax.f32 %v1844, 0.0
        %v1850 = vmax.f32 %v1845, 0.0
        %v1851 = vmax.f32 %v1846, 0.0
        %v1852 = vmul.f32 %v1847, 0.5
        %v1853 = vtanh.pop %v1852
        %v1854 = vadd.f32 %v1853, 1.0
        %v1855 = vmul.f32 %v1854, 0.5
        %v1856 = vmul.f32 %v1855, %v1415
        %v1857 = vmul.f32 %v1855, %v1490
        %v1858 = vmul.f32 %v1855, %v1565
        %v1859 = vld [vmem:[%s653] sm:$0xff]
        %v1860 = vld [vmem:[%s653 + $0x8] sm:$0xff]
        %v1861 = vld [vmem:[%s653 + $0x10] sm:$0xff]
        %v1862 = vld [vmem:[%s653 + $0x18] sm:$0xff]
        %v1863 = vadd.f32 %v1848, %v1859
        %v1864 = vadd.f32 %v1849, %v1860
        %v1865 = vadd.f32 %v1850, %v1861
        %v1866 = vadd.f32 %v1851, %v1862
        %v1867 = vld [vmem:[%s660] sm:$0xff]
        %v1868 = vadd.f32 %v1856, %v1867
        %s1869 = scalar_lea.vmem %s660, 8 [#allocation3]
        %v1870 = vld [vmem:[%s1869] sm:$0xff]
        %v1871 = vadd.f32 %v1857, %v1870
        %s1872 = scalar_lea.vmem %s660, 16 [#allocation3]
        %v1873 = vld [vmem:[%s1872] sm:$0xff]
        %v1874 = vadd.f32 %v1858, %v1873
        %v1875 = vld [vmem:[%s5] sm:$0xff]
        %v1876 = vld [vmem:[%s5 + $0x8] sm:$0xff]
        %v1877 = vld [vmem:[%s5 + $0x10] sm:$0xff]
        %v1878 = vld [vmem:[%s5 + $0x18] sm:$0xff]
        %v1879 = vadd.f32 %v1863, %v1864
        %v1880 = vadd.f32 %v1879, %v1865
        %v1881 = vadd.f32 %v1880, %v1866
        %v1882 = vrot.slane %v1881, 4
        %v1883 = vadd.f32 %v1881, %v1882
        %v1884 = vrot.slane %v1883, 2
        %v1885 = vadd.f32 %v1883, %v1884
        %v1886 = vrot.slane %v1885, 1
        %v1887 = vadd.f32 %v1885, %v1886
        %v1888 = vrcp.pop 32.0
        %v1889 = vmul.f32 %v1887, %v1888
        %v1890 = vsub.f32 %v1863, %v1889
        %v1891 = vsub.f32 %v1864, %v1889
        %v1892 = vsub.f32 %v1865, %v1889
        %v1893 = vsub.f32 %v1866, %v1889
        %v1894 = vmul.f32 %v1890, %v1890
        %v1895 = vmul.f32 %v1891, %v1891
        %v1896 = vmul.f32 %v1892, %v1892
        %v1897 = vmul.f32 %v1893, %v1893
        %v1898 = vadd.f32 %v1894, %v1895
        %v1899 = vadd.f32 %v1898, %v1896
        %v1900 = vadd.f32 %v1899, %v1897
        %v1901 = vrot.slane %v1900, 4
        %v1902 = vadd.f32 %v1900, %v1901
        %v1903 = vrot.slane %v1902, 2
        %v1904 = vadd.f32 %v1902, %v1903
        %v1905 = vrot.slane %v1904, 1
        %v1906 = vadd.f32 %v1904, %v1905
        %v1907 = vmul.f32 %v1906, %v1888
        %v1908 = vadd.f32 %v1907, 1e-05
        %v1909 = vrsqrt.pop %v1908
        %v1910 = vmul.f32 %v1890, %v1909
        %v1911 = vmul.f32 %v1891, %v1909
        %v1912 = vmul.f32 %v1892, %v1909
        %v1913 = vmul.f32 %v1893, %v1909
        %1915 = vset.pattern.permute.xlu0 0
        %1916 = vperm.xlu0 %1915, %v1875
        %v1917 = vpop.permute.xlu0 %1916
        %1920 = vset.pattern.permute.xlu0 0
        %1921 = vperm.xlu0 %1920, %v1876
        %v1922 = vpop.permute.xlu0 %1921
        %1925 = vset.pattern.permute.xlu0 0
        %1926 = vperm.xlu0 %1925, %v1877
        %v1927 = vpop.permute.xlu0 %1926
        %1930 = vset.pattern.permute.xlu0 0
        %1931 = vperm.xlu0 %1930, %v1878
        %v1932 = vpop.permute.xlu0 %1931
        %v1934 = vmul.f32 %v1910, %v1917
        %v1935 = vmul.f32 %v1911, %v1922
        %v1936 = vmul.f32 %v1912, %v1927
        %v1937 = vmul.f32 %v1913, %v1932
        %1938 = vset.pattern.permute.xlu0 1
        %1939 = vperm.xlu0 %1938, %v1875
        %v1940 = vpop.permute.xlu0 %1939
        %1942 = vset.pattern.permute.xlu0 1
        %1943 = vperm.xlu0 %1942, %v1876
        %v1944 = vpop.permute.xlu0 %1943
        %1946 = vset.pattern.permute.xlu0 1
        %1947 = vperm.xlu0 %1946, %v1877
        %v1948 = vpop.permute.xlu0 %1947
        %1950 = vset.pattern.permute.xlu0 1
        %1951 = vperm.xlu0 %1950, %v1878
        %v1952 = vpop.permute.xlu0 %1951
        %v1954 = vadd.f32 %v1934, %v1940
        %v1955 = vadd.f32 %v1935, %v1944
        %v1956 = vadd.f32 %v1936, %v1948
        %v1957 = vadd.f32 %v1937, %v1952
        %1958 = vst [vmem:[%s728] sm:$0xff] %v1954
        %1959 = vst [vmem:[%s728 + $0x8] sm:$0xff] %v1955
        %1960 = vst [vmem:[%s728 + $0x10] sm:$0xff] %v1956
        %1961 = vst [vmem:[%s728 + $0x18] sm:$0xff] %v1957
        %v1962 = vmul.f32 %v1868, %v1868
        %v1963 = vmul.f32 %v1871, %v1871
        %v1964 = vadd.f32 %v1962, %v1963
        %v1965 = vmul.f32 %v1874, %v1874
        %v1966 = vadd.f32 %v1964, %v1965
        %v1967 = vrot.slane %v1966, 4
        %v1968 = vadd.f32 %v1966, %v1967
        %v1969 = vrot.slane %v1968, 2
        %v1970 = vadd.f32 %v1968, %v1969
        %v1971 = vrot.slane %v1970, 1
        %v1972 = vadd.f32 %v1970, %v1971
        %vm1973 = vcmp.gt.f32.partialorder %v1972, 0.0
        %v1974 = vrsqrt.pop %v1972
        %v1975 = vmul.f32 %v1974, 2.828427
        %v1976 = vsel %vm1973, %v1975, 1.0
        %v1977 = vmul.f32 %v1868, %v1976
        %1978 = vst [vmem:[%s735] sm:$0xff] %v1977
        %v1979 = vmul.f32 %v1871, %v1976
        %s1980 = scalar_lea.vmem %s735, 8 [#allocation8]
        %1981 = vst [vmem:[%s1980] sm:$0xff] %v1979
        %v1982 = vmul.f32 %v1874, %v1976
        %s1983 = scalar_lea.vmem %s735, 16 [#allocation8]
        %1984 = vst [vmem:[%s1983] sm:$0xff] %v1982
        %s1985 = sand.u32 %s355, 1
        %s1986 = scalar_lea.sflag [#allocation7], %s1985
        %s1987 = sand.u32 %s355, 1
        %s1988 = smul.addr %s1987, 32
        %s1989 = scalar_lea.vmem [#allocation6], %s1988
        %s1990 = sand.u32 %s381, 1
        %s1991 = scalar_lea.sflag [#allocation9], %s1990
        %s1992 = sand.u32 %s381, 1
        %s1993 = smul.addr %s1992, 24
        %s1994 = scalar_lea.vmem [#allocation8], %s1993
        // Predicated region
        $region229: #{tpu_custom_call.1} parent=211 // pred_check
          %p1995 = pneg %p365
        $region230: #{tpu_custom_call.1} parent=211 // pred_check_branch
          %1997 = sbr.rel (%p1995) target = $region232
        $region231: #{tpu_custom_call.1} parent=211 // pred_region
          %s1999 = ssub.s32 512, 512
          %2000 = vsyncadd %s1986, %s1999
          %s2001 = smul.addr %s33, 128
          %s2002 = scalar_lea.hbm %s14, %s2001
          %s2003 = sshll.u32 %s1989, 4
          %s2004 = int_to_ptr.vmem [resolvable:$true] %s2003
          %2009 = dma.vmem_to_hbm [thread:$0]  %s2004, 512, %s2002, %s1986, 128, 256, 8
        $region232: #{tpu_custom_call.1} parent=211 // pred_fallthru
          _
        // Predicated region
        $region233: #{tpu_custom_call.1} parent=211 // pred_check
          %p2010 = pneg %p391
        $region234: #{tpu_custom_call.1} parent=211 // pred_check_branch
          %2012 = sbr.rel (%p2010) target = $region236
        $region235: #{tpu_custom_call.1} parent=211 // pred_region
          %s2014 = ssub.s32 384, 384
          %2015 = vsyncadd %s1991, %s2014
          %s2016 = smul.addr %s33, 128
          %s2017 = scalar_lea.hbm %s15, %s2016
          %s2018 = sshll.u32 %s1994, 4
          %s2019 = int_to_ptr.vmem [resolvable:$true] %s2018
          %2024 = dma.vmem_to_hbm [thread:$0]  %s2019, 384, %s2017, %s1991, 128, 256, 8
        $region236: #{tpu_custom_call.1} parent=211 // pred_fallthru
          _
      $region212: #{tpu_custom_call.1} parent=5 // pred_fallthru
        _
      %p2025 = scmp.le.s32.totalorder 2, %s28
      // Predicated region
      $region237: #{tpu_custom_call.1} parent=5 // pred_check
        %p2026 = pneg %p2025
      $region238: #{tpu_custom_call.1} parent=5 // pred_check_branch
        %2028 = sbr.rel (%p2026) target = $region240
      $region239: #{tpu_custom_call.1} parent=5 // pred_region
        %s2029 = ssub.s32 %s28, 2
        // Predicated region
        $region241: #{tpu_custom_call.1} parent=239 // pred_check
          %p2030 = pneg %p371
        $region242: #{tpu_custom_call.1} parent=239 // pred_check_branch
          %2032 = sbr.rel (%p2030) target = $region244
        $region243: #{tpu_custom_call.1} parent=239 // pred_region
          %s2033 = sand.u32 %s356, 1
          %s2034 = scalar_lea.sflag [#allocation7], %s2033
          %s2035 = sand.u32 %s356, 1
          %s2036 = smul.addr %s2035, 32
          %s2037 = scalar_lea.vmem [#allocation6], %s2036
          %2038 = dma.done %s2034, 512
        $region244: #{tpu_custom_call.1} parent=239 // pred_fallthru
          _
        // Predicated region
        $region245: #{tpu_custom_call.1} parent=239 // pred_check
          %p2039 = pneg %p397
        $region246: #{tpu_custom_call.1} parent=239 // pred_check_branch
          %2041 = sbr.rel (%p2039) target = $region248
        $region247: #{tpu_custom_call.1} parent=239 // pred_region
          %s2042 = sand.u32 %s382, 1
          %s2043 = scalar_lea.sflag [#allocation9], %s2042
          %s2044 = sand.u32 %s382, 1
          %s2045 = smul.addr %s2044, 24
          %s2046 = scalar_lea.vmem [#allocation8], %s2045
          %2047 = dma.done %s2043, 384
        $region248: #{tpu_custom_call.1} parent=239 // pred_fallthru
          _
      $region240: #{tpu_custom_call.1} parent=5 // pred_fallthru
        _
    $region6: #{tpu_custom_call.1} parent=1 // loop_footer
      %s32 = sadd.s32 1, %s28
    $region7: #{tpu_custom_call.1} parent=1 // loop_footer_branch
      %27 = sbr.rel target = $region3
    $region8: #{tpu_custom_call.1} parent=1 // loop_exit
      _
    %2048 = vsyncpa [#allocation7], 1
    %s2049 = scalar_lea.sflag [#allocation7], 1
    %2050 = vsyncpa %s2049, 1
    %2051 = vsyncpa [#allocation9], 1
    %s2052 = scalar_lea.sflag [#allocation9], 1
    %2053 = vsyncpa %s2052, 1

</llo_original>
